<compile_context>
chip_gen: v5e
topology: v5e:2x2
jax: 0.10.0
libtpu: 0.0.40
codegen_flags: <defaults>
</compile_context>

<pallas_src>
import functools

import jax
import jax.numpy as jnp
from jax.experimental import pallas as pl
from jax.experimental.pallas import tpu as pltpu


def _silu(x):
    return x * jax.nn.sigmoid(x)


# ----------------------------------------------------------------------------------
# Single fused kernel: LayerNorm + edge precompute + all n_layers layers
# ----------------------------------------------------------------------------------

def fused_clsf_kernel(edge_et_ref, edge_2e_ref, qry_in_ref, nbr_ref, proto_ref,
                      ln_g_ref, ln_b_ref,
                      w1x_ref, w1d_ref, b1_ref, w2_ref, b2_ref,
                      tw1_ref, tb1_ref, tw2_ref, tb2_ref, tw3_ref,
                      qry_out_ref):
    f32 = jnp.float32
    num_proto = proto_ref.shape[0]
    num_qry = qry_in_ref.shape[0]
    num_edges = edge_et_ref.shape[0]
    n_layers = w2_ref.shape[0]

    # ---- LayerNorm(qry_embeds) ---------------------------------------------------
    x = qry_in_ref[...]                                       # (Q, D)
    mean = jnp.mean(x, axis=-1, keepdims=True)
    xc = x - mean
    var = jnp.mean(xc * xc, axis=-1, keepdims=True)
    qry = xc * jax.lax.rsqrt(var + 1e-5) * ln_g_ref[...] + ln_b_ref[...]

    # ---- edge one-hots, built on the VPU (never touch HBM) -----------------------
    eids_et = edge_et_ref[...]                                 # (E, 2) int32
    row_e = eids_et[:, 0:1]                                    # (E, 1)
    col_e = eids_et[:, 1:2]                                    # (E, 1)
    p_iota = jax.lax.broadcasted_iota(jnp.int32, (num_edges, num_proto), 1)
    q_iota = jax.lax.broadcasted_iota(jnp.int32, (num_edges, num_qry), 1) + num_proto
    row_oh_p = (p_iota == row_e).astype(f32)                   # (E, P)
    col_oh_p = (p_iota == col_e).astype(f32)                   # (E, P)
    row_oh_q = (q_iota == row_e).astype(f32)                   # (E, Q)
    col_oh_q = (q_iota == col_e).astype(f32)                   # (E, Q)
    diff_oh_q = row_oh_q - col_oh_q                            # (E, Q)

    # scatter matrix restricted to query rows, built directly in (Q, E) orientation
    # from the (2, E) copy of edge_index -> no in-kernel transpose needed.
    eids_2e = edge_2e_ref[...]                                 # (2, E) int32
    row_b = eids_2e[0:1, :]                                    # (1, E)
    qe_iota = jax.lax.broadcasted_iota(jnp.int32, (num_qry, num_edges), 0) + num_proto
    scat = (qe_iota == row_b).astype(f32)                      # (Q, E)
    deg = jnp.sum(scat, axis=-1, keepdims=True)                # (Q, 1)
    inv_cnt = 1.0 / jnp.maximum(deg, 1.0)                      # (Q, 1)

    # ---- layer-invariant gathers (computed once, stay in vregs/VMEM) -------------
    proto = proto_ref[...]                                     # (P, D)
    coord_diff_proto = jnp.dot(row_oh_p - col_oh_p, proto,
                               preferred_element_type=f32)     # (E, D)
    xn_col = (jnp.dot(col_oh_p, proto, preferred_element_type=f32)
              + jnp.dot(col_oh_q, nbr_ref[...], preferred_element_type=f32))  # (E, D)

    # ---- statically unrolled layer loop (single kernel invocation) ---------------
    for l in range(n_layers):
        # coord2dist: x[row] - x[col] = proto part + (oh diff) @ qry
        coord_diff = coord_diff_proto + jnp.dot(diff_oh_q, qry,
                                                preferred_element_type=f32)    # (E, D)
        sqr_dist = jnp.sum(coord_diff * coord_diff, axis=-1, keepdims=True)    # (E, 1)

        # msg_mlp: Linear(D+1, H) + SiLU + Linear(H, H) + SiLU
        # (the concat [xn_col, sqr_dist] is folded into w1x / w1d)
        h = jnp.dot(xn_col, w1x_ref[l], preferred_element_type=f32)
        h = _silu(h + sqr_dist * w1d_ref[l] + b1_ref[l])
        msg = _silu(jnp.dot(h, w2_ref[l], preferred_element_type=f32) + b2_ref[l])

        # trans_mlp: Linear + SiLU + Linear + SiLU + Linear(H, 1, no bias)
        t = _silu(jnp.dot(msg, tw1_ref[l], preferred_element_type=f32) + tb1_ref[l])
        t = _silu(jnp.dot(t, tw2_ref[l], preferred_element_type=f32) + tb2_ref[l])
        t_scale = jnp.sum(t * tw3_ref[l], axis=-1, keepdims=True)              # (E, 1)

        trans = coord_diff * t_scale                                           # (E, D)

        # diff_mean restricted to query rows: (Q,E)@(E,D) scatter-add, * 1/max(deg,1)
        seg_sum = jnp.dot(scat, trans, preferred_element_type=f32)             # (Q, D)
        qry = qry + seg_sum * inv_cnt

    qry_out_ref[...] = qry


# ----------------------------------------------------------------------------------
# Wrapper
# ----------------------------------------------------------------------------------

@functools.partial(jax.jit, static_argnames=("n_layers",))
def clsf_forward(qry_embeds, neighbor, proto_embeds, edge_index, params, n_layers):
    """Equivalent of clsf.forward(qry_embeds, neighbor, proto_embeds, edge_index)."""
    num_qry, d = qry_embeds.shape
    edge_2e = edge_index.astype(jnp.int32)        # (2, E)
    edge_et = edge_2e.T                           # (E, 2) — layout only, avoids in-kernel transpose

    inputs = [edge_et, edge_2e,
              qry_embeds.astype(jnp.float32),
              neighbor.astype(jnp.float32),
              proto_embeds.astype(jnp.float32),
              params["ln_gamma"], params["ln_beta"],
              params["w1x"], params["w1d"], params["b1"], params["w2"], params["b2"],
              params["tw1"], params["tb1"], params["tw2"], params["tb2"], params["tw3"]]

    qry_out = pl.pallas_call(
        fused_clsf_kernel,
        out_shape=jax.ShapeDtypeStruct((num_qry, d), jnp.float32),
        in_specs=[pl.BlockSpec(memory_space=pltpu.MemorySpace.VMEM) for _ in inputs],
        out_specs=pl.BlockSpec(memory_space=pltpu.MemorySpace.VMEM),
    )(*inputs)

    return neighbor, qry_out


# ----------------------------------------------------------------------------------
# Deterministic parameter construction (shapes mirror the PyTorch __init__),
# layer-stacked along a leading n_layers axis.
# ----------------------------------------------------------------------------------

def _linear_params(key, fan_in, fan_out):
    """PyTorch nn.Linear default init: U(-1/sqrt(fan_in), 1/sqrt(fan_in))."""
    kw, kb = jax.random.split(key)
    bound = 1.0 / jnp.sqrt(jnp.float32(fan_in))
    w = jax.random.uniform(kw, (fan_in, fan_out), jnp.float32, -bound, bound)
    b = jax.random.uniform(kb, (1, fan_out), jnp.float32, -bound, bound)
    return w, b


def make_params(key, str_dim, in_dim, n_layers):
    d, h = str_dim, in_dim
    names = ["w1x", "w1d", "b1", "w2", "b2", "tw1", "tb1", "tw2", "tb2", "tw3"]
    stacks = {k: [] for k in names}
    for _ in range(n_layers):
        keys = jax.random.split(key, 6)
        key = keys[0]
        # msg_mlp: Linear(d+1, h), Linear(h, h)
        w1, b1 = _linear_params(keys[1], d + 1, h)
        w2, b2 = _linear_params(keys[2], h, h)
        # trans_mlp: Linear(h, h), Linear(h, h), Linear(h, 1, bias=False) xavier gain=0.001
        tw1, tb1 = _linear_params(keys[3], h, h)
        tw2, tb2 = _linear_params(keys[4], h, h)
        xav_bound = 0.001 * jnp.sqrt(6.0 / (h + 1))
        tw3 = jax.random.uniform(keys[5], (1, h), jnp.float32, -xav_bound, xav_bound)
        vals = {"w1x": w1[:d, :], "w1d": w1[d:d + 1, :], "b1": b1,
                "w2": w2, "b2": b2,
                "tw1": tw1, "tb1": tb1, "tw2": tw2, "tb2": tb2, "tw3": tw3}
        for k, v in vals.items():
            stacks[k].append(v)
        # TODO(synk): posi_mlp exists in the PyTorch __init__ but is never used in
        # forward(), so it is intentionally not constructed here.
    params = {k: jnp.stack(v, axis=0) for k, v in stacks.items()}
    params["ln_gamma"] = jnp.ones((1, in_dim), jnp.float32)
    params["ln_beta"] = jnp.zeros((1, in_dim), jnp.float32)
    return params


# ----------------------------------------------------------------------------------
# Pure-JAX reference (mirrors the PyTorch forward) for a sanity check
# ----------------------------------------------------------------------------------

def ref_forward(qry, neighbor, proto, edge_index, params, n_layers):
    with jax.default_matmul_precision("float32"):
        g, b = params["ln_gamma"], params["ln_beta"]
        mean = jnp.mean(qry, -1, keepdims=True)
        var = jnp.mean((qry - mean) ** 2, -1, keepdims=True)
        qry = (qry - mean) / jnp.sqrt(var + 1e-5) * g + b

        row, col = edge_index[0], edge_index[1]
        num_proto = proto.shape[0]
        xn = jnp.concatenate([proto, neighbor], axis=0)
        for i in range(n_layers):
            x = jnp.concatenate([proto, qry], axis=0)
            n = x.shape[0]
            coord_diff = x[row] - x[col]
            sqr = jnp.sum(coord_diff ** 2, 1, keepdims=True)
            h = _silu(xn[col] @ params["w1x"][i] + sqr * params["w1d"][i]
                      + params["b1"][i])
            msg = _silu(h @ params["w2"][i] + params["b2"][i])
            t = _silu(msg @ params["tw1"][i] + params["tb1"][i])
            t = _silu(t @ params["tw2"][i] + params["tb2"][i])
            t_scale = jnp.sum(t * params["tw3"][i], -1, keepdims=True)
            trans = coord_diff * t_scale
            seg_sum = jnp.zeros((n, trans.shape[1]), jnp.float32).at[row].add(trans)
            counts = jnp.zeros((n, 1), jnp.float32).at[row].add(1.0)
            trans_mean = seg_sum / jnp.maximum(counts, 1.0)
            qry = qry + trans_mean[num_proto:]
        return neighbor, qry


# ----------------------------------------------------------------------------------
# Main
# ----------------------------------------------------------------------------------

if __name__ == "__main__":
    # str_dim must equal in_dim for the PyTorch module to run (LayerNorm(in_dim) is
    # applied to str_dim-wide embeddings), so use a single feature width D.
    STR_DIM = IN_DIM = 32
    N_LAYERS = 2
    NUM_PROTO = 4
    NUM_QRY = 8
    NUM_NODES = NUM_PROTO + NUM_QRY
    NUM_EDGES = 16

    key = jax.random.PRNGKey(0)
    k_q, k_n, k_p, k_e, k_w = jax.random.split(key, 5)

    qry_embeds = jax.random.normal(k_q, (NUM_QRY, STR_DIM), jnp.float32)
    neighbor = jax.random.normal(k_n, (NUM_QRY, STR_DIM), jnp.float32)
    proto_embeds = jax.random.normal(k_p, (NUM_PROTO, STR_DIM), jnp.float32)
    edge_index = jax.random.randint(k_e, (2, NUM_EDGES), 0, NUM_NODES, jnp.int32)

    params = make_params(k_w, STR_DIM, IN_DIM, N_LAYERS)

    out_neighbor, out_qry = clsf_forward(
        qry_embeds, neighbor, proto_embeds, edge_index, params, N_LAYERS)
    out_neighbor = jax.block_until_ready(out_neighbor)
    out_qry = jax.block_until_ready(out_qry)

    # sanity check against the pure-JAX reference
    ref_neighbor, ref_qry = ref_forward(
        qry_embeds, neighbor, proto_embeds, edge_index, params, N_LAYERS)
    assert out_neighbor.shape == (NUM_QRY, STR_DIM)
    assert out_qry.shape == (NUM_QRY, STR_DIM)
    assert jnp.allclose(out_neighbor, ref_neighbor, atol=1e-3, rtol=1e-3)
    assert jnp.allclose(out_qry, ref_qry, atol=1e-3, rtol=1e-3)

    print("KERNEL_OK")
</pallas_src>

<mosaic_0001>
module attributes {stable_mosaic.version = 11 : i64} {
  func.func @fused_clsf_kernel(%arg0: memref<16x2xi32, #tpu.memory_space<vmem>>, %arg1: memref<2x16xi32, #tpu.memory_space<vmem>>, %arg2: memref<8x32xf32, #tpu.memory_space<vmem>>, %arg3: memref<8x32xf32, #tpu.memory_space<vmem>>, %arg4: memref<4x32xf32, #tpu.memory_space<vmem>>, %arg5: memref<1x32xf32, #tpu.memory_space<vmem>>, %arg6: memref<1x32xf32, #tpu.memory_space<vmem>>, %arg7: memref<2x32x32xf32, #tpu.memory_space<vmem>>, %arg8: memref<2x1x32xf32, #tpu.memory_space<vmem>>, %arg9: memref<2x1x32xf32, #tpu.memory_space<vmem>>, %arg10: memref<2x32x32xf32, #tpu.memory_space<vmem>>, %arg11: memref<2x1x32xf32, #tpu.memory_space<vmem>>, %arg12: memref<2x32x32xf32, #tpu.memory_space<vmem>>, %arg13: memref<2x1x32xf32, #tpu.memory_space<vmem>>, %arg14: memref<2x32x32xf32, #tpu.memory_space<vmem>>, %arg15: memref<2x1x32xf32, #tpu.memory_space<vmem>>, %arg16: memref<2x1x32xf32, #tpu.memory_space<vmem>>, %arg17: memref<8x32xf32, #tpu.memory_space<vmem>>) attributes {dimension_semantics = [], scalar_prefetch = 0 : i64, scratch_operands = 0 : i64, tpu.core_type = #tpu.core_type<tc>} {
    %c0 = arith.constant 0 : index
    %c0_0 = arith.constant 0 : index
    %0 = vector.load %arg2[%c0, %c0_0] : memref<8x32xf32, #tpu.memory_space<vmem>>, vector<8x32xf32>
    %cst = arith.constant dense<0.000000e+00> : vector<8xf32>
    %1 = vector.multi_reduction <add>, %0, %cst [1] : vector<8x32xf32> to vector<8xf32>
    %2 = vector.shape_cast %1 : vector<8xf32> to vector<8x1xf32>
    %cst_1 = arith.constant 3.200000e+01 : f32
    %3 = vector.broadcast %cst_1 : f32 to vector<8x1xf32>
    %4 = arith.divf %2, %3 : vector<8x1xf32>
    %5 = vector.broadcast %4 : vector<8x1xf32> to vector<8x32xf32>
    %6 = arith.subf %0, %5 : vector<8x32xf32>
    %7 = arith.mulf %6, %6 : vector<8x32xf32>
    %cst_2 = arith.constant dense<0.000000e+00> : vector<8xf32>
    %8 = vector.multi_reduction <add>, %7, %cst_2 [1] : vector<8x32xf32> to vector<8xf32>
    %9 = vector.shape_cast %8 : vector<8xf32> to vector<8x1xf32>
    %cst_3 = arith.constant 3.200000e+01 : f32
    %10 = vector.broadcast %cst_3 : f32 to vector<8x1xf32>
    %11 = arith.divf %9, %10 : vector<8x1xf32>
    %cst_4 = arith.constant 9.99999974E-6 : f32
    %12 = vector.broadcast %cst_4 : f32 to vector<8x1xf32>
    %13 = arith.addf %11, %12 : vector<8x1xf32>
    %14 = math.rsqrt %13 : vector<8x1xf32>
    %15 = vector.broadcast %14 : vector<8x1xf32> to vector<8x32xf32>
    %16 = arith.mulf %6, %15 : vector<8x32xf32>
    %c0_5 = arith.constant 0 : index
    %c0_6 = arith.constant 0 : index
    %17 = vector.load %arg5[%c0_5, %c0_6] : memref<1x32xf32, #tpu.memory_space<vmem>>, vector<1x32xf32>
    %18 = vector.broadcast %17 : vector<1x32xf32> to vector<8x32xf32>
    %19 = arith.mulf %16, %18 : vector<8x32xf32>
    %c0_7 = arith.constant 0 : index
    %c0_8 = arith.constant 0 : index
    %20 = vector.load %arg6[%c0_7, %c0_8] : memref<1x32xf32, #tpu.memory_space<vmem>>, vector<1x32xf32>
    %21 = vector.broadcast %20 : vector<1x32xf32> to vector<8x32xf32>
    %22 = arith.addf %19, %21 : vector<8x32xf32>
    %c0_9 = arith.constant 0 : index
    %c0_10 = arith.constant 0 : index
    %23 = vector.load %arg0[%c0_9, %c0_10] : memref<16x2xi32, #tpu.memory_space<vmem>>, vector<16x2xi32>
    %24 = vector.extract_strided_slice %23 {offsets = [0, 0], sizes = [16, 1], strides = [1, 1]} : vector<16x2xi32> to vector<16x1xi32>
    %25 = vector.extract_strided_slice %23 {offsets = [0, 1], sizes = [16, 1], strides = [1, 1]} : vector<16x2xi32> to vector<16x1xi32>
    %26 = tpu.iota {dimensions = array<i32: 1>} : vector<16x4xi32>
    %27 = tpu.iota {dimensions = array<i32: 1>} : vector<16x8xi32>
    %c4_i32 = arith.constant 4 : i32
    %28 = vector.broadcast %c4_i32 : i32 to vector<16x8xi32>
    %29 = arith.addi %27, %28 : vector<16x8xi32>
    %30 = vector.broadcast %24 : vector<16x1xi32> to vector<16x4xi32>
    %31 = arith.cmpi eq, %26, %30 : vector<16x4xi32>
    %32 = arith.extui %31 : vector<16x4xi1> to vector<16x4xi32>
    %33 = arith.sitofp %32 : vector<16x4xi32> to vector<16x4xf32>
    %34 = vector.broadcast %25 : vector<16x1xi32> to vector<16x4xi32>
    %35 = arith.cmpi eq, %26, %34 : vector<16x4xi32>
    %36 = arith.extui %35 : vector<16x4xi1> to vector<16x4xi32>
    %37 = arith.sitofp %36 : vector<16x4xi32> to vector<16x4xf32>
    %38 = vector.broadcast %24 : vector<16x1xi32> to vector<16x8xi32>
    %39 = arith.cmpi eq, %29, %38 : vector<16x8xi32>
    %40 = arith.extui %39 : vector<16x8xi1> to vector<16x8xi32>
    %41 = arith.sitofp %40 : vector<16x8xi32> to vector<16x8xf32>
    %42 = vector.broadcast %25 : vector<16x1xi32> to vector<16x8xi32>
    %43 = arith.cmpi eq, %29, %42 : vector<16x8xi32>
    %44 = arith.extui %43 : vector<16x8xi1> to vector<16x8xi32>
    %45 = arith.sitofp %44 : vector<16x8xi32> to vector<16x8xf32>
    %46 = arith.subf %41, %45 : vector<16x8xf32>
    %c0_11 = arith.constant 0 : index
    %c0_12 = arith.constant 0 : index
    %47 = vector.load %arg1[%c0_11, %c0_12] : memref<2x16xi32, #tpu.memory_space<vmem>>, vector<2x16xi32>
    %48 = vector.extract_strided_slice %47 {offsets = [0, 0], sizes = [1, 16], strides = [1, 1]} : vector<2x16xi32> to vector<1x16xi32>
    %49 = tpu.iota {dimensions = array<i32: 0>} : vector<8x16xi32>
    %c4_i32_13 = arith.constant 4 : i32
    %50 = vector.broadcast %c4_i32_13 : i32 to vector<8x16xi32>
    %51 = arith.addi %49, %50 : vector<8x16xi32>
    %52 = vector.broadcast %48 : vector<1x16xi32> to vector<8x16xi32>
    %53 = arith.cmpi eq, %51, %52 : vector<8x16xi32>
    %54 = arith.extui %53 : vector<8x16xi1> to vector<8x16xi32>
    %55 = arith.sitofp %54 : vector<8x16xi32> to vector<8x16xf32>
    %cst_14 = arith.constant dense<0.000000e+00> : vector<8xf32>
    %56 = vector.multi_reduction <add>, %55, %cst_14 [1] : vector<8x16xf32> to vector<8xf32>
    %57 = vector.shape_cast %56 : vector<8xf32> to vector<8x1xf32>
    %cst_15 = arith.constant 1.000000e+00 : f32
    %58 = vector.broadcast %cst_15 : f32 to vector<8x1xf32>
    %59 = arith.maximumf %57, %58 : vector<8x1xf32>
    %cst_16 = arith.constant 1.000000e+00 : f32
    %60 = vector.broadcast %cst_16 : f32 to vector<8x1xf32>
    %61 = arith.divf %60, %59 : vector<8x1xf32>
    %c0_17 = arith.constant 0 : index
    %c0_18 = arith.constant 0 : index
    %62 = vector.load %arg4[%c0_17, %c0_18] : memref<4x32xf32, #tpu.memory_space<vmem>>, vector<4x32xf32>
    %63 = arith.subf %33, %37 : vector<16x4xf32>
    %cst_19 = arith.constant dense<0.000000e+00> : vector<16x32xf32>
    %64 = tpu.matmul %63, %62, %cst_19 {dimension_numbers = #tpu.dot_dimension_numbers<[1], [0], [0], [1], [0, 0, 1, 1], [], []>} : vector<16x4xf32>, vector<4x32xf32>, vector<16x32xf32> -> vector<16x32xf32>
    %cst_20 = arith.constant dense<0.000000e+00> : vector<16x32xf32>
    %65 = tpu.matmul %37, %62, %cst_20 {dimension_numbers = #tpu.dot_dimension_numbers<[1], [0], [0], [1], [0, 0, 1, 1], [], []>} : vector<16x4xf32>, vector<4x32xf32>, vector<16x32xf32> -> vector<16x32xf32>
    %c0_21 = arith.constant 0 : index
    %c0_22 = arith.constant 0 : index
    %66 = vector.load %arg3[%c0_21, %c0_22] : memref<8x32xf32, #tpu.memory_space<vmem>>, vector<8x32xf32>
    %cst_23 = arith.constant dense<0.000000e+00> : vector<16x32xf32>
    %67 = tpu.matmul %45, %66, %cst_23 {dimension_numbers = #tpu.dot_dimension_numbers<[1], [0], [0], [1], [0, 0, 1, 1], [], []>} : vector<16x8xf32>, vector<8x32xf32>, vector<16x32xf32> -> vector<16x32xf32>
    %68 = arith.addf %65, %67 : vector<16x32xf32>
    %cst_24 = arith.constant dense<0.000000e+00> : vector<16x32xf32>
    %69 = tpu.matmul %46, %22, %cst_24 {dimension_numbers = #tpu.dot_dimension_numbers<[1], [0], [0], [1], [0, 0, 1, 1], [], []>} : vector<16x8xf32>, vector<8x32xf32>, vector<16x32xf32> -> vector<16x32xf32>
    %70 = arith.addf %64, %69 : vector<16x32xf32>
    %71 = arith.mulf %70, %70 : vector<16x32xf32>
    %cst_25 = arith.constant dense<0.000000e+00> : vector<16xf32>
    %72 = vector.multi_reduction <add>, %71, %cst_25 [1] : vector<16x32xf32> to vector<16xf32>
    %73 = vector.shape_cast %72 : vector<16xf32> to vector<16x1xf32>
    %c0_26 = arith.constant 0 : index
    %c0_27 = arith.constant 0 : index
    %c0_28 = arith.constant 0 : index
    %74 = vector.load %arg7[%c0_26, %c0_27, %c0_28] : memref<2x32x32xf32, #tpu.memory_space<vmem>>, vector<1x32x32xf32>
    %75 = vector.shape_cast %74 : vector<1x32x32xf32> to vector<32x32xf32>
    %cst_29 = arith.constant dense<0.000000e+00> : vector<16x32xf32>
    %76 = tpu.matmul %68, %75, %cst_29 {dimension_numbers = #tpu.dot_dimension_numbers<[1], [0], [0], [1], [0, 0, 1, 1], [], []>} : vector<16x32xf32>, vector<32x32xf32>, vector<16x32xf32> -> vector<16x32xf32>
    %c0_30 = arith.constant 0 : index
    %c0_31 = arith.constant 0 : index
    %c0_32 = arith.constant 0 : index
    %77 = vector.load %arg8[%c0_30, %c0_31, %c0_32] : memref<2x1x32xf32, #tpu.memory_space<vmem>>, vector<1x1x32xf32>
    %78 = vector.shape_cast %77 : vector<1x1x32xf32> to vector<1x32xf32>
    %79 = vector.broadcast %73 : vector<16x1xf32> to vector<16x32xf32>
    %80 = vector.broadcast %78 : vector<1x32xf32> to vector<16x32xf32>
    %81 = arith.mulf %79, %80 : vector<16x32xf32>
    %82 = arith.addf %76, %81 : vector<16x32xf32>
    %c0_33 = arith.constant 0 : index
    %c0_34 = arith.constant 0 : index
    %c0_35 = arith.constant 0 : index
    %83 = vector.load %arg9[%c0_33, %c0_34, %c0_35] : memref<2x1x32xf32, #tpu.memory_space<vmem>>, vector<1x1x32xf32>
    %84 = vector.shape_cast %83 : vector<1x1x32xf32> to vector<1x32xf32>
    %85 = vector.broadcast %84 : vector<1x32xf32> to vector<16x32xf32>
    %86 = arith.addf %82, %85 : vector<16x32xf32>
    %87 = arith.negf %86 : vector<16x32xf32>
    %88 = math.exp %87 : vector<16x32xf32>
    %cst_36 = arith.constant 1.000000e+00 : f32
    %89 = vector.broadcast %cst_36 : f32 to vector<16x32xf32>
    %90 = arith.addf %89, %88 : vector<16x32xf32>
    %91 = arith.divf %89, %90 : vector<16x32xf32>
    %92 = arith.mulf %86, %91 : vector<16x32xf32>
    %c0_37 = arith.constant 0 : index
    %c0_38 = arith.constant 0 : index
    %c0_39 = arith.constant 0 : index
    %93 = vector.load %arg10[%c0_37, %c0_38, %c0_39] : memref<2x32x32xf32, #tpu.memory_space<vmem>>, vector<1x32x32xf32>
    %94 = vector.shape_cast %93 : vector<1x32x32xf32> to vector<32x32xf32>
    %cst_40 = arith.constant dense<0.000000e+00> : vector<16x32xf32>
    %95 = tpu.matmul %92, %94, %cst_40 {dimension_numbers = #tpu.dot_dimension_numbers<[1], [0], [0], [1], [0, 0, 1, 1], [], []>} : vector<16x32xf32>, vector<32x32xf32>, vector<16x32xf32> -> vector<16x32xf32>
    %c0_41 = arith.constant 0 : index
    %c0_42 = arith.constant 0 : index
    %c0_43 = arith.constant 0 : index
    %96 = vector.load %arg11[%c0_41, %c0_42, %c0_43] : memref<2x1x32xf32, #tpu.memory_space<vmem>>, vector<1x1x32xf32>
    %97 = vector.shape_cast %96 : vector<1x1x32xf32> to vector<1x32xf32>
    %98 = vector.broadcast %97 : vector<1x32xf32> to vector<16x32xf32>
    %99 = arith.addf %95, %98 : vector<16x32xf32>
    %100 = arith.negf %99 : vector<16x32xf32>
    %101 = math.exp %100 : vector<16x32xf32>
    %cst_44 = arith.constant 1.000000e+00 : f32
    %102 = vector.broadcast %cst_44 : f32 to vector<16x32xf32>
    %103 = arith.addf %102, %101 : vector<16x32xf32>
    %104 = arith.divf %102, %103 : vector<16x32xf32>
    %105 = arith.mulf %99, %104 : vector<16x32xf32>
    %c0_45 = arith.constant 0 : index
    %c0_46 = arith.constant 0 : index
    %c0_47 = arith.constant 0 : index
    %106 = vector.load %arg12[%c0_45, %c0_46, %c0_47] : memref<2x32x32xf32, #tpu.memory_space<vmem>>, vector<1x32x32xf32>
    %107 = vector.shape_cast %106 : vector<1x32x32xf32> to vector<32x32xf32>
    %cst_48 = arith.constant dense<0.000000e+00> : vector<16x32xf32>
    %108 = tpu.matmul %105, %107, %cst_48 {dimension_numbers = #tpu.dot_dimension_numbers<[1], [0], [0], [1], [0, 0, 1, 1], [], []>} : vector<16x32xf32>, vector<32x32xf32>, vector<16x32xf32> -> vector<16x32xf32>
    %c0_49 = arith.constant 0 : index
    %c0_50 = arith.constant 0 : index
    %c0_51 = arith.constant 0 : index
    %109 = vector.load %arg13[%c0_49, %c0_50, %c0_51] : memref<2x1x32xf32, #tpu.memory_space<vmem>>, vector<1x1x32xf32>
    %110 = vector.shape_cast %109 : vector<1x1x32xf32> to vector<1x32xf32>
    %111 = vector.broadcast %110 : vector<1x32xf32> to vector<16x32xf32>
    %112 = arith.addf %108, %111 : vector<16x32xf32>
    %113 = arith.negf %112 : vector<16x32xf32>
    %114 = math.exp %113 : vector<16x32xf32>
    %cst_52 = arith.constant 1.000000e+00 : f32
    %115 = vector.broadcast %cst_52 : f32 to vector<16x32xf32>
    %116 = arith.addf %115, %114 : vector<16x32xf32>
    %117 = arith.divf %115, %116 : vector<16x32xf32>
    %118 = arith.mulf %112, %117 : vector<16x32xf32>
    %c0_53 = arith.constant 0 : index
    %c0_54 = arith.constant 0 : index
    %c0_55 = arith.constant 0 : index
    %119 = vector.load %arg14[%c0_53, %c0_54, %c0_55] : memref<2x32x32xf32, #tpu.memory_space<vmem>>, vector<1x32x32xf32>
    %120 = vector.shape_cast %119 : vector<1x32x32xf32> to vector<32x32xf32>
    %cst_56 = arith.constant dense<0.000000e+00> : vector<16x32xf32>
    %121 = tpu.matmul %118, %120, %cst_56 {dimension_numbers = #tpu.dot_dimension_numbers<[1], [0], [0], [1], [0, 0, 1, 1], [], []>} : vector<16x32xf32>, vector<32x32xf32>, vector<16x32xf32> -> vector<16x32xf32>
    %c0_57 = arith.constant 0 : index
    %c0_58 = arith.constant 0 : index
    %c0_59 = arith.constant 0 : index
    %122 = vector.load %arg15[%c0_57, %c0_58, %c0_59] : memref<2x1x32xf32, #tpu.memory_space<vmem>>, vector<1x1x32xf32>
    %123 = vector.shape_cast %122 : vector<1x1x32xf32> to vector<1x32xf32>
    %124 = vector.broadcast %123 : vector<1x32xf32> to vector<16x32xf32>
    %125 = arith.addf %121, %124 : vector<16x32xf32>
    %126 = arith.negf %125 : vector<16x32xf32>
    %127 = math.exp %126 : vector<16x32xf32>
    %cst_60 = arith.constant 1.000000e+00 : f32
    %128 = vector.broadcast %cst_60 : f32 to vector<16x32xf32>
    %129 = arith.addf %128, %127 : vector<16x32xf32>
    %130 = arith.divf %128, %129 : vector<16x32xf32>
    %131 = arith.mulf %125, %130 : vector<16x32xf32>
    %c0_61 = arith.constant 0 : index
    %c0_62 = arith.constant 0 : index
    %c0_63 = arith.constant 0 : index
    %132 = vector.load %arg16[%c0_61, %c0_62, %c0_63] : memref<2x1x32xf32, #tpu.memory_space<vmem>>, vector<1x1x32xf32>
    %133 = vector.shape_cast %132 : vector<1x1x32xf32> to vector<1x32xf32>
    %134 = vector.broadcast %133 : vector<1x32xf32> to vector<16x32xf32>
    %135 = arith.mulf %131, %134 : vector<16x32xf32>
    %cst_64 = arith.constant dense<0.000000e+00> : vector<16xf32>
    %136 = vector.multi_reduction <add>, %135, %cst_64 [1] : vector<16x32xf32> to vector<16xf32>
    %137 = vector.shape_cast %136 : vector<16xf32> to vector<16x1xf32>
    %138 = vector.broadcast %137 : vector<16x1xf32> to vector<16x32xf32>
    %139 = arith.mulf %70, %138 : vector<16x32xf32>
    %cst_65 = arith.constant dense<0.000000e+00> : vector<8x32xf32>
    %140 = tpu.matmul %55, %139, %cst_65 {dimension_numbers = #tpu.dot_dimension_numbers<[1], [0], [0], [1], [0, 0, 1, 1], [], []>} : vector<8x16xf32>, vector<16x32xf32>, vector<8x32xf32> -> vector<8x32xf32>
    %141 = vector.broadcast %61 : vector<8x1xf32> to vector<8x32xf32>
    %142 = arith.mulf %140, %141 : vector<8x32xf32>
    %143 = arith.addf %22, %142 : vector<8x32xf32>
    %cst_66 = arith.constant dense<0.000000e+00> : vector<16x32xf32>
    %144 = tpu.matmul %46, %143, %cst_66 {dimension_numbers = #tpu.dot_dimension_numbers<[1], [0], [0], [1], [0, 0, 1, 1], [], []>} : vector<16x8xf32>, vector<8x32xf32>, vector<16x32xf32> -> vector<16x32xf32>
    %145 = arith.addf %64, %144 : vector<16x32xf32>
    %146 = arith.mulf %145, %145 : vector<16x32xf32>
    %cst_67 = arith.constant dense<0.000000e+00> : vector<16xf32>
    %147 = vector.multi_reduction <add>, %146, %cst_67 [1] : vector<16x32xf32> to vector<16xf32>
    %148 = vector.shape_cast %147 : vector<16xf32> to vector<16x1xf32>
    %c1 = arith.constant 1 : index
    %c0_68 = arith.constant 0 : index
    %c0_69 = arith.constant 0 : index
    %149 = vector.load %arg7[%c1, %c0_68, %c0_69] : memref<2x32x32xf32, #tpu.memory_space<vmem>>, vector<1x32x32xf32>
    %150 = vector.shape_cast %149 : vector<1x32x32xf32> to vector<32x32xf32>
    %cst_70 = arith.constant dense<0.000000e+00> : vector<16x32xf32>
    %151 = tpu.matmul %68, %150, %cst_70 {dimension_numbers = #tpu.dot_dimension_numbers<[1], [0], [0], [1], [0, 0, 1, 1], [], []>} : vector<16x32xf32>, vector<32x32xf32>, vector<16x32xf32> -> vector<16x32xf32>
    %c1_71 = arith.constant 1 : index
    %c0_72 = arith.constant 0 : index
    %c0_73 = arith.constant 0 : index
    %152 = vector.load %arg8[%c1_71, %c0_72, %c0_73] : memref<2x1x32xf32, #tpu.memory_space<vmem>>, vector<1x1x32xf32>
    %153 = vector.shape_cast %152 : vector<1x1x32xf32> to vector<1x32xf32>
    %154 = vector.broadcast %148 : vector<16x1xf32> to vector<16x32xf32>
    %155 = vector.broadcast %153 : vector<1x32xf32> to vector<16x32xf32>
    %156 = arith.mulf %154, %155 : vector<16x32xf32>
    %157 = arith.addf %151, %156 : vector<16x32xf32>
    %c1_74 = arith.constant 1 : index
    %c0_75 = arith.constant 0 : index
    %c0_76 = arith.constant 0 : index
    %158 = vector.load %arg9[%c1_74, %c0_75, %c0_76] : memref<2x1x32xf32, #tpu.memory_space<vmem>>, vector<1x1x32xf32>
    %159 = vector.shape_cast %158 : vector<1x1x32xf32> to vector<1x32xf32>
    %160 = vector.broadcast %159 : vector<1x32xf32> to vector<16x32xf32>
    %161 = arith.addf %157, %160 : vector<16x32xf32>
    %162 = arith.negf %161 : vector<16x32xf32>
    %163 = math.exp %162 : vector<16x32xf32>
    %cst_77 = arith.constant 1.000000e+00 : f32
    %164 = vector.broadcast %cst_77 : f32 to vector<16x32xf32>
    %165 = arith.addf %164, %163 : vector<16x32xf32>
    %166 = arith.divf %164, %165 : vector<16x32xf32>
    %167 = arith.mulf %161, %166 : vector<16x32xf32>
    %c1_78 = arith.constant 1 : index
    %c0_79 = arith.constant 0 : index
    %c0_80 = arith.constant 0 : index
    %168 = vector.load %arg10[%c1_78, %c0_79, %c0_80] : memref<2x32x32xf32, #tpu.memory_space<vmem>>, vector<1x32x32xf32>
    %169 = vector.shape_cast %168 : vector<1x32x32xf32> to vector<32x32xf32>
    %cst_81 = arith.constant dense<0.000000e+00> : vector<16x32xf32>
    %170 = tpu.matmul %167, %169, %cst_81 {dimension_numbers = #tpu.dot_dimension_numbers<[1], [0], [0], [1], [0, 0, 1, 1], [], []>} : vector<16x32xf32>, vector<32x32xf32>, vector<16x32xf32> -> vector<16x32xf32>
    %c1_82 = arith.constant 1 : index
    %c0_83 = arith.constant 0 : index
    %c0_84 = arith.constant 0 : index
    %171 = vector.load %arg11[%c1_82, %c0_83, %c0_84] : memref<2x1x32xf32, #tpu.memory_space<vmem>>, vector<1x1x32xf32>
    %172 = vector.shape_cast %171 : vector<1x1x32xf32> to vector<1x32xf32>
    %173 = vector.broadcast %172 : vector<1x32xf32> to vector<16x32xf32>
    %174 = arith.addf %170, %173 : vector<16x32xf32>
    %175 = arith.negf %174 : vector<16x32xf32>
    %176 = math.exp %175 : vector<16x32xf32>
    %cst_85 = arith.constant 1.000000e+00 : f32
    %177 = vector.broadcast %cst_85 : f32 to vector<16x32xf32>
    %178 = arith.addf %177, %176 : vector<16x32xf32>
    %179 = arith.divf %177, %178 : vector<16x32xf32>
    %180 = arith.mulf %174, %179 : vector<16x32xf32>
    %c1_86 = arith.constant 1 : index
    %c0_87 = arith.constant 0 : index
    %c0_88 = arith.constant 0 : index
    %181 = vector.load %arg12[%c1_86, %c0_87, %c0_88] : memref<2x32x32xf32, #tpu.memory_space<vmem>>, vector<1x32x32xf32>
    %182 = vector.shape_cast %181 : vector<1x32x32xf32> to vector<32x32xf32>
    %cst_89 = arith.constant dense<0.000000e+00> : vector<16x32xf32>
    %183 = tpu.matmul %180, %182, %cst_89 {dimension_numbers = #tpu.dot_dimension_numbers<[1], [0], [0], [1], [0, 0, 1, 1], [], []>} : vector<16x32xf32>, vector<32x32xf32>, vector<16x32xf32> -> vector<16x32xf32>
    %c1_90 = arith.constant 1 : index
    %c0_91 = arith.constant 0 : index
    %c0_92 = arith.constant 0 : index
    %184 = vector.load %arg13[%c1_90, %c0_91, %c0_92] : memref<2x1x32xf32, #tpu.memory_space<vmem>>, vector<1x1x32xf32>
    %185 = vector.shape_cast %184 : vector<1x1x32xf32> to vector<1x32xf32>
    %186 = vector.broadcast %185 : vector<1x32xf32> to vector<16x32xf32>
    %187 = arith.addf %183, %186 : vector<16x32xf32>
    %188 = arith.negf %187 : vector<16x32xf32>
    %189 = math.exp %188 : vector<16x32xf32>
    %cst_93 = arith.constant 1.000000e+00 : f32
    %190 = vector.broadcast %cst_93 : f32 to vector<16x32xf32>
    %191 = arith.addf %190, %189 : vector<16x32xf32>
    %192 = arith.divf %190, %191 : vector<16x32xf32>
    %193 = arith.mulf %187, %192 : vector<16x32xf32>
    %c1_94 = arith.constant 1 : index
    %c0_95 = arith.constant 0 : index
    %c0_96 = arith.constant 0 : index
    %194 = vector.load %arg14[%c1_94, %c0_95, %c0_96] : memref<2x32x32xf32, #tpu.memory_space<vmem>>, vector<1x32x32xf32>
    %195 = vector.shape_cast %194 : vector<1x32x32xf32> to vector<32x32xf32>
    %cst_97 = arith.constant dense<0.000000e+00> : vector<16x32xf32>
    %196 = tpu.matmul %193, %195, %cst_97 {dimension_numbers = #tpu.dot_dimension_numbers<[1], [0], [0], [1], [0, 0, 1, 1], [], []>} : vector<16x32xf32>, vector<32x32xf32>, vector<16x32xf32> -> vector<16x32xf32>
    %c1_98 = arith.constant 1 : index
    %c0_99 = arith.constant 0 : index
    %c0_100 = arith.constant 0 : index
    %197 = vector.load %arg15[%c1_98, %c0_99, %c0_100] : memref<2x1x32xf32, #tpu.memory_space<vmem>>, vector<1x1x32xf32>
    %198 = vector.shape_cast %197 : vector<1x1x32xf32> to vector<1x32xf32>
    %199 = vector.broadcast %198 : vector<1x32xf32> to vector<16x32xf32>
    %200 = arith.addf %196, %199 : vector<16x32xf32>
    %201 = arith.negf %200 : vector<16x32xf32>
    %202 = math.exp %201 : vector<16x32xf32>
    %cst_101 = arith.constant 1.000000e+00 : f32
    %203 = vector.broadcast %cst_101 : f32 to vector<16x32xf32>
    %204 = arith.addf %203, %202 : vector<16x32xf32>
    %205 = arith.divf %203, %204 : vector<16x32xf32>
    %206 = arith.mulf %200, %205 : vector<16x32xf32>
    %c1_102 = arith.constant 1 : index
    %c0_103 = arith.constant 0 : index
    %c0_104 = arith.constant 0 : index
    %207 = vector.load %arg16[%c1_102, %c0_103, %c0_104] : memref<2x1x32xf32, #tpu.memory_space<vmem>>, vector<1x1x32xf32>
    %208 = vector.shape_cast %207 : vector<1x1x32xf32> to vector<1x32xf32>
    %209 = vector.broadcast %208 : vector<1x32xf32> to vector<16x32xf32>
    %210 = arith.mulf %206, %209 : vector<16x32xf32>
    %cst_105 = arith.constant dense<0.000000e+00> : vector<16xf32>
    %211 = vector.multi_reduction <add>, %210, %cst_105 [1] : vector<16x32xf32> to vector<16xf32>
    %212 = vector.shape_cast %211 : vector<16xf32> to vector<16x1xf32>
    %213 = vector.broadcast %212 : vector<16x1xf32> to vector<16x32xf32>
    %214 = arith.mulf %145, %213 : vector<16x32xf32>
    %cst_106 = arith.constant dense<0.000000e+00> : vector<8x32xf32>
    %215 = tpu.matmul %55, %214, %cst_106 {dimension_numbers = #tpu.dot_dimension_numbers<[1], [0], [0], [1], [0, 0, 1, 1], [], []>} : vector<8x16xf32>, vector<16x32xf32>, vector<8x32xf32> -> vector<8x32xf32>
    %216 = vector.broadcast %61 : vector<8x1xf32> to vector<8x32xf32>
    %217 = arith.mulf %215, %216 : vector<8x32xf32>
    %218 = arith.addf %143, %217 : vector<8x32xf32>
    %c0_107 = arith.constant 0 : index
    %c0_108 = arith.constant 0 : index
    %219 = vector.load %arg17[%c0_107, %c0_108] : memref<8x32xf32, #tpu.memory_space<vmem>>, vector<8x32xf32>
    tpu.vector_store %arg17[%c0_107, %c0_108], %218 {strides = array<i32>} : memref<8x32xf32, #tpu.memory_space<vmem>>, vector<8x32xf32>,
    return
  }
}

</mosaic_0001>

<llo_original>
// kernel: clsf_forward.1
$region0: #{clsf_forward.1}
  #allocation0 [shape = 'u32[]', space=smem, size = 0x4, offset = 0x4, fixed_abs, tag = 'smem constant byte address 0x4 - core index']
  #allocation1 [shape = 'u32[72,128]{1,0:T(1,128)}', space=vmem, size = 0x9000, scoped, tag = 'internal scratch']
  %s0 = inlined_call_operand.vmem [shape: s32[16,2], index: 0, kind: input, shape index: {}]
  %s1 = inlined_call_operand.vmem [shape: s32[2,16], index: 1, kind: input, shape index: {}]
  %s2 = inlined_call_operand.vmem [shape: f32[8,32], index: 2, kind: input, shape index: {}]
  %s3 = inlined_call_operand.vmem [shape: f32[8,32], index: 3, kind: input, shape index: {}]
  %s4 = inlined_call_operand.hbm [shape: f32[4,32], index: 4, kind: input, shape index: {}]
  %s5 = inlined_call_operand.vmem [shape: f32[1,32], index: 5, kind: input, shape index: {}]
  %s6 = inlined_call_operand.vmem [shape: f32[1,32], index: 6, kind: input, shape index: {}]
  %s7 = inlined_call_operand.hbm [shape: f32[2,32,32], index: 7, kind: input, shape index: {}]
  %s8 = inlined_call_operand.vmem [shape: f32[2,1,32], index: 8, kind: input, shape index: {}]
  %s9 = inlined_call_operand.vmem [shape: f32[2,1,32], index: 9, kind: input, shape index: {}]
  %s10 = inlined_call_operand.hbm [shape: f32[2,32,32], index: 10, kind: input, shape index: {}]
  %s11 = inlined_call_operand.vmem [shape: f32[2,1,32], index: 11, kind: input, shape index: {}]
  %s12 = inlined_call_operand.hbm [shape: f32[2,32,32], index: 12, kind: input, shape index: {}]
  %s13 = inlined_call_operand.vmem [shape: f32[2,1,32], index: 13, kind: input, shape index: {}]
  %s14 = inlined_call_operand.hbm [shape: f32[2,32,32], index: 14, kind: input, shape index: {}]
  %s15 = inlined_call_operand.hbm [shape: f32[2,1,32], index: 15, kind: input, shape index: {}]
  %s16 = inlined_call_operand.hbm [shape: f32[2,1,32], index: 16, kind: input, shape index: {}]
  %s17 = inlined_call_operand.hbm [shape: f32[8,32], index: 17, kind: output, shape index: {}]
  %s18 = sld [smem:[#allocation0]]
  $region106: #{clsf_forward.1} parent=0
    _
  %s20 = ssub.s32 1, %s18
  %s21 = scalar_select 0, %s20, %s18
  $region1: #{clsf_forward.1} parent=0
    #allocation2 [shape = 'u8[2048]{0}', space=vmem, size = 0x800, scoped, tag = 'input window, operand 4, single buffered']
    #allocation3 [shape = 's32[1]{0}', space=sflag, size = 0x4, scoped, tag = 'scoped memory for clsf_forward.1']
    #allocation4 [shape = 's32[1]{0}', space=sflag, size = 0x4, scoped, tag = 'scoped memory for clsf_forward.1']
    #allocation5 [shape = 'u8[32768]{0}', space=vmem, size = 0x8000, scoped, tag = 'input window, operand 7, single buffered']
    #allocation6 [shape = 's32[1]{0}', space=sflag, size = 0x4, scoped, tag = 'scoped memory for clsf_forward.1']
    #allocation7 [shape = 'u8[32768]{0}', space=vmem, size = 0x8000, scoped, tag = 'input window, operand 10, single buffered']
    #allocation8 [shape = 'u8[32768]{0}', space=vmem, size = 0x8000, scoped, tag = 'input window, operand 12, single buffered']
    #allocation9 [shape = 's32[1]{0}', space=sflag, size = 0x4, scoped, tag = 'scoped memory for clsf_forward.1']
    #allocation10 [shape = 'u8[32768]{0}', space=vmem, size = 0x8000, scoped, tag = 'input window, operand 14, single buffered']
    #allocation11 [shape = 'u8[1024]{0}', space=vmem, size = 0x400, scoped, tag = 'input window, operand 15, single buffered']
    #allocation12 [shape = 's32[1]{0}', space=sflag, size = 0x4, scoped, tag = 'scoped memory for clsf_forward.1']
    #allocation13 [shape = 'u8[1024]{0}', space=vmem, size = 0x400, scoped, tag = 'input window, operand 16, single buffered']
    #allocation14 [shape = 'u8[4096]{0}', space=vmem, size = 0x1000, scoped, tag = 'output window, operand 0, single buffered']
    %22 = vsyncpa [#allocation3], 0
    %23 = vsyncpa [#allocation6], 0
    %24 = vsyncpa [#allocation9], 0
    %25 = vsyncpa [#allocation12], 0
    %26 = vsyncpa [#allocation4], 0
    // Predicated region
    $region2: #{clsf_forward.1} parent=1 // pred_check
      _
    $region3: #{clsf_forward.1} parent=1 // pred_check_branch
      %28 = sbr.rel (0) target = $region5
    $region4: #{clsf_forward.1} parent=1 // pred_region
      _
    $region5: #{clsf_forward.1} parent=1 // pred_fallthru
      _
    // Predicated region
    $region6: #{clsf_forward.1} parent=1 // pred_check
      _
    $region7: #{clsf_forward.1} parent=1 // pred_check_branch
      %30 = sbr.rel (0) target = $region9
    $region8: #{clsf_forward.1} parent=1 // pred_region
      _
    $region9: #{clsf_forward.1} parent=1 // pred_fallthru
      _
    // Predicated region
    $region10: #{clsf_forward.1} parent=1 // pred_check
      _
    $region11: #{clsf_forward.1} parent=1 // pred_check_branch
      %32 = sbr.rel (0) target = $region13
    $region12: #{clsf_forward.1} parent=1 // pred_region
      _
    $region13: #{clsf_forward.1} parent=1 // pred_fallthru
      _
    // Predicated region
    $region14: #{clsf_forward.1} parent=1 // pred_check
      _
    $region15: #{clsf_forward.1} parent=1 // pred_check_branch
      %34 = sbr.rel (0) target = $region17
    $region16: #{clsf_forward.1} parent=1 // pred_region
      _
    $region17: #{clsf_forward.1} parent=1 // pred_fallthru
      _
    // Predicated region
    $region18: #{clsf_forward.1} parent=1 // pred_check
      _
    $region19: #{clsf_forward.1} parent=1 // pred_check_branch
      %36 = sbr.rel (0) target = $region21
    $region20: #{clsf_forward.1} parent=1 // pred_region
      %38 = vsyncadd [#allocation3], 0
      %s40 = sshll.u32 %s4, 4
      %s41 = int_to_ptr.hbm [resolvable:$true] %s40
      %s42 = sshll.u32 [#allocation2], 4
      %s43 = int_to_ptr.vmem [resolvable:$true] %s42
      %45 = dma.hbm_to_vmem [thread:$0]  %s41, 64, %s43, [#allocation3]
    $region21: #{clsf_forward.1} parent=1 // pred_fallthru
      _
    // Predicated region
    $region22: #{clsf_forward.1} parent=1 // pred_check
      _
    $region23: #{clsf_forward.1} parent=1 // pred_check_branch
      %47 = sbr.rel (0) target = $region25
    $region24: #{clsf_forward.1} parent=1 // pred_region
      _
    $region25: #{clsf_forward.1} parent=1 // pred_fallthru
      _
    // Predicated region
    $region26: #{clsf_forward.1} parent=1 // pred_check
      _
    $region27: #{clsf_forward.1} parent=1 // pred_check_branch
      %49 = sbr.rel (0) target = $region29
    $region28: #{clsf_forward.1} parent=1 // pred_region
      _
    $region29: #{clsf_forward.1} parent=1 // pred_fallthru
      _
    // Predicated region
    $region30: #{clsf_forward.1} parent=1 // pred_check
      _
    $region31: #{clsf_forward.1} parent=1 // pred_check_branch
      %51 = sbr.rel (0) target = $region33
    $region32: #{clsf_forward.1} parent=1 // pred_region
      %53 = vsyncadd [#allocation6], 0
      %s54 = sshll.u32 %s7, 4
      %s55 = int_to_ptr.hbm [resolvable:$true] %s54
      %s56 = sshll.u32 [#allocation5], 4
      %s57 = int_to_ptr.vmem [resolvable:$true] %s56
      %62 = dma.hbm_to_vmem [thread:$0]  %s55, 1024, %s57, [#allocation6], 128, 128, 8
    $region33: #{clsf_forward.1} parent=1 // pred_fallthru
      _
    // Predicated region
    $region34: #{clsf_forward.1} parent=1 // pred_check
      _
    $region35: #{clsf_forward.1} parent=1 // pred_check_branch
      %64 = sbr.rel (0) target = $region37
    $region36: #{clsf_forward.1} parent=1 // pred_region
      _
    $region37: #{clsf_forward.1} parent=1 // pred_fallthru
      _
    // Predicated region
    $region38: #{clsf_forward.1} parent=1 // pred_check
      _
    $region39: #{clsf_forward.1} parent=1 // pred_check_branch
      %66 = sbr.rel (0) target = $region41
    $region40: #{clsf_forward.1} parent=1 // pred_region
      _
    $region41: #{clsf_forward.1} parent=1 // pred_fallthru
      _
    // Predicated region
    $region42: #{clsf_forward.1} parent=1 // pred_check
      _
    $region43: #{clsf_forward.1} parent=1 // pred_check_branch
      %68 = sbr.rel (0) target = $region45
    $region44: #{clsf_forward.1} parent=1 // pred_region
      %70 = vsyncadd [#allocation6], 0
      %s71 = sshll.u32 %s10, 4
      %s72 = int_to_ptr.hbm [resolvable:$true] %s71
      %s73 = sshll.u32 [#allocation7], 4
      %s74 = int_to_ptr.vmem [resolvable:$true] %s73
      %79 = dma.hbm_to_vmem [thread:$0]  %s72, 1024, %s74, [#allocation6], 128, 128, 8
    $region45: #{clsf_forward.1} parent=1 // pred_fallthru
      _
    // Predicated region
    $region46: #{clsf_forward.1} parent=1 // pred_check
      _
    $region47: #{clsf_forward.1} parent=1 // pred_check_branch
      %81 = sbr.rel (0) target = $region49
    $region48: #{clsf_forward.1} parent=1 // pred_region
      _
    $region49: #{clsf_forward.1} parent=1 // pred_fallthru
      _
    // Predicated region
    $region50: #{clsf_forward.1} parent=1 // pred_check
      _
    $region51: #{clsf_forward.1} parent=1 // pred_check_branch
      %83 = sbr.rel (0) target = $region53
    $region52: #{clsf_forward.1} parent=1 // pred_region
      %85 = vsyncadd [#allocation9], 0
      %s86 = sshll.u32 %s12, 4
      %s87 = int_to_ptr.hbm [resolvable:$true] %s86
      %s88 = sshll.u32 [#allocation8], 4
      %s89 = int_to_ptr.vmem [resolvable:$true] %s88
      %94 = dma.hbm_to_vmem [thread:$0]  %s87, 1024, %s89, [#allocation9], 128, 128, 8
    $region53: #{clsf_forward.1} parent=1 // pred_fallthru
      _
    // Predicated region
    $region54: #{clsf_forward.1} parent=1 // pred_check
      _
    $region55: #{clsf_forward.1} parent=1 // pred_check_branch
      %96 = sbr.rel (0) target = $region57
    $region56: #{clsf_forward.1} parent=1 // pred_region
      _
    $region57: #{clsf_forward.1} parent=1 // pred_fallthru
      _
    // Predicated region
    $region58: #{clsf_forward.1} parent=1 // pred_check
      _
    $region59: #{clsf_forward.1} parent=1 // pred_check_branch
      %98 = sbr.rel (0) target = $region61
    $region60: #{clsf_forward.1} parent=1 // pred_region
      %100 = vsyncadd [#allocation9], 0
      %s101 = sshll.u32 %s14, 4
      %s102 = int_to_ptr.hbm [resolvable:$true] %s101
      %s103 = sshll.u32 [#allocation10], 4
      %s104 = int_to_ptr.vmem [resolvable:$true] %s103
      %109 = dma.hbm_to_vmem [thread:$0]  %s102, 1024, %s104, [#allocation9], 128, 128, 8
    $region61: #{clsf_forward.1} parent=1 // pred_fallthru
      _
    // Predicated region
    $region62: #{clsf_forward.1} parent=1 // pred_check
      _
    $region63: #{clsf_forward.1} parent=1 // pred_check_branch
      %111 = sbr.rel (0) target = $region65
    $region64: #{clsf_forward.1} parent=1 // pred_region
      %113 = vsyncadd [#allocation12], 0
      %s114 = sshll.u32 %s15, 4
      %s115 = int_to_ptr.hbm [resolvable:$true] %s114
      %s116 = sshll.u32 [#allocation11], 4
      %s117 = int_to_ptr.vmem [resolvable:$true] %s116
      %122 = dma.hbm_to_vmem [thread:$0]  %s115, 32, %s117, [#allocation12], 16, 16, 1
    $region65: #{clsf_forward.1} parent=1 // pred_fallthru
      _
    // Predicated region
    $region66: #{clsf_forward.1} parent=1 // pred_check
      _
    $region67: #{clsf_forward.1} parent=1 // pred_check_branch
      %124 = sbr.rel (0) target = $region69
    $region68: #{clsf_forward.1} parent=1 // pred_region
      %126 = vsyncadd [#allocation12], 0
      %s127 = sshll.u32 %s16, 4
      %s128 = int_to_ptr.hbm [resolvable:$true] %s127
      %s129 = sshll.u32 [#allocation13], 4
      %s130 = int_to_ptr.vmem [resolvable:$true] %s129
      %135 = dma.hbm_to_vmem [thread:$0]  %s128, 32, %s130, [#allocation12], 16, 16, 1
    $region69: #{clsf_forward.1} parent=1 // pred_fallthru
      _
    // Predicated region
    $region70: #{clsf_forward.1} parent=1 // pred_check
      _
    $region71: #{clsf_forward.1} parent=1 // pred_check_branch
      %137 = sbr.rel (0) target = $region73
    $region72: #{clsf_forward.1} parent=1 // pred_region
      %139 = dma.done [#allocation3], 64
    $region73: #{clsf_forward.1} parent=1 // pred_fallthru
      _
    // Predicated region
    $region74: #{clsf_forward.1} parent=1 // pred_check
      _
    $region75: #{clsf_forward.1} parent=1 // pred_check_branch
      %141 = sbr.rel (0) target = $region77
    $region76: #{clsf_forward.1} parent=1 // pred_region
      %143 = dma.done [#allocation6], 1024
    $region77: #{clsf_forward.1} parent=1 // pred_fallthru
      _
    // Predicated region
    $region78: #{clsf_forward.1} parent=1 // pred_check
      _
    $region79: #{clsf_forward.1} parent=1 // pred_check_branch
      %145 = sbr.rel (0) target = $region81
    $region80: #{clsf_forward.1} parent=1 // pred_region
      %147 = dma.done [#allocation6], 1024
    $region81: #{clsf_forward.1} parent=1 // pred_fallthru
      _
    // Predicated region
    $region82: #{clsf_forward.1} parent=1 // pred_check
      _
    $region83: #{clsf_forward.1} parent=1 // pred_check_branch
      %149 = sbr.rel (0) target = $region85
    $region84: #{clsf_forward.1} parent=1 // pred_region
      %151 = dma.done [#allocation9], 1024
    $region85: #{clsf_forward.1} parent=1 // pred_fallthru
      _
    // Predicated region
    $region86: #{clsf_forward.1} parent=1 // pred_check
      _
    $region87: #{clsf_forward.1} parent=1 // pred_check_branch
      %153 = sbr.rel (0) target = $region89
    $region88: #{clsf_forward.1} parent=1 // pred_region
      %155 = dma.done [#allocation9], 1024
    $region89: #{clsf_forward.1} parent=1 // pred_fallthru
      _
    // Predicated region
    $region90: #{clsf_forward.1} parent=1 // pred_check
      _
    $region91: #{clsf_forward.1} parent=1 // pred_check_branch
      %157 = sbr.rel (0) target = $region93
    $region92: #{clsf_forward.1} parent=1 // pred_region
      %159 = dma.done [#allocation12], 32
    $region93: #{clsf_forward.1} parent=1 // pred_fallthru
      _
    // Predicated region
    $region94: #{clsf_forward.1} parent=1 // pred_check
      _
    $region95: #{clsf_forward.1} parent=1 // pred_check_branch
      %161 = sbr.rel (0) target = $region97
    $region96: #{clsf_forward.1} parent=1 // pred_region
      %163 = dma.done [#allocation12], 32
    $region97: #{clsf_forward.1} parent=1 // pred_fallthru
      _
    %v164 = vld [vmem:[%s2] sm:$0xff]
    %vm165 = vcmask 261120
    %v166 = vsel %vm165, %v164, 0.0
    %167 = vadd.xlane.f32.xlu0 %v166
    %v168 = vpop.xlane.xlu0 %167
    %v169 = vrcp.pop 32.0
    %v170 = vmul.f32 32.0, %v169
    %v171 = vsub.f32 1.0, %v170
    %v172 = vmul.f32 %v169, %v171
    %v173 = vadd.f32 %v169, %v172
    %vm174 = vweird.f32 %v169
    %v175 = vsel %vm174, %v169, %v173
    %v176 = vmul.f32 %v168, %v175
    %v177 = vsub.f32 %v164, %v176
    %v178 = vmul.f32 %v177, %v177
    %v179 = vsel %vm165, %v178, 0.0
    %180 = vadd.xlane.f32.xlu0 %v179
    %v181 = vpop.xlane.xlu0 %180
    %v182 = vmul.f32 %v181, %v175
    %v183 = vadd.f32 %v182, 1e-05
    %v184 = vrsqrt.pop %v183
    %v185 = vmul.f32 %v184, %v183
    %v186 = vmul.f32 %v185, %v184
    %v187 = vmul.f32 0.5, %v186
    %v188 = vsub.f32 1.5, %v187
    %v189 = vmul.f32 %v184, %v188
    %vm190 = vweird.f32 %v183
    %vm191 = vweird.f32 %v184
    %vm192 = vmor %vm190, %vm191
    %v193 = vsel %vm192, %v184, %v189
    %v194 = vmul.f32 %v177, %v193
    %v195 = vld [vmem:[%s5] sm:$0x1]
    %v197 = vperm.slane %v195, 0
    %v199 = vmul.f32 %v194, %v197
    %v200 = vld [vmem:[%s6] sm:$0x1]
    %v202 = vperm.slane %v200, 0
    %v204 = vadd.f32 %v199, %v202
    %v205 = vld [vmem:[%s0] sm:$0xff]
    %v206 = vld [vmem:[%s0 + $0x8] sm:$0xff]
    %v207 = vlaneseq
    %v208 = vand.u32 %v207, 127
    %v209 = vadd.s32 %v208, 4
    %210 = vset.pattern.permute.xlu0 0
    %211 = vperm.xlu0 %210, %v205
    %v212 = vpop.permute.xlu0 %211
    %213 = vset.pattern.permute.xlu0 0
    %214 = vperm.xlu0 %213, %v206
    %v215 = vpop.permute.xlu0 %214
    %vm216 = vcmp.eq.s32.totalorder %v208, %v212
    %vm217 = vcmp.eq.s32.totalorder %v208, %v215
    %v218 = vsel %vm216, 1, 0
    %v219 = vsel %vm217, 1, 0
    %v220 = vcvt.s32.f32 %v218
    %v221 = vcvt.s32.f32 %v219
    %222 = vset.pattern.permute.xlu0 1
    %223 = vperm.xlu0 %222, %v205
    %v224 = vpop.permute.xlu0 %223
    %225 = vset.pattern.permute.xlu0 1
    %226 = vperm.xlu0 %225, %v206
    %v227 = vpop.permute.xlu0 %226
    %vm228 = vcmp.eq.s32.totalorder %v208, %v224
    %vm229 = vcmp.eq.s32.totalorder %v208, %v227
    %v230 = vsel %vm228, 1, 0
    %v231 = vsel %vm229, 1, 0
    %v232 = vcvt.s32.f32 %v230
    %v233 = vcvt.s32.f32 %v231
    %vm234 = vcmp.eq.s32.totalorder %v209, %v212
    %vm235 = vcmp.eq.s32.totalorder %v209, %v215
    %v236 = vsel %vm234, 1, 0
    %v237 = vsel %vm235, 1, 0
    %v238 = vcvt.s32.f32 %v236
    %v239 = vcvt.s32.f32 %v237
    %vm240 = vcmp.eq.s32.totalorder %v209, %v224
    %vm241 = vcmp.eq.s32.totalorder %v209, %v227
    %v242 = vsel %vm240, 1, 0
    %v243 = vsel %vm241, 1, 0
    %v244 = vcvt.s32.f32 %v242
    %v245 = vcvt.s32.f32 %v243
    %v246 = vsub.f32 %v238, %v244
    %v247 = vsub.f32 %v239, %v245
    %v248 = vld [vmem:[%s1] sm:$0x3]
    %v249 = vlaneseq
    %v250 = vshrl.u32 %v249, 7
    %v251 = vadd.s32 %v250, 4
    %v252 = vperm.slane %v248, 0
    %vm253 = vcmp.eq.s32.totalorder %v251, %v252
    %v254 = vsel %vm253, 1, 0
    %v255 = vcvt.s32.f32 %v254
    %vm256 = vcmask 130048
    %v257 = vsel %vm256, %v255, 0.0
    %258 = vadd.xlane.f32.xlu0 %v257
    %v259 = vpop.xlane.xlu0 %258
    %v260 = vmax.f32 %v259, 1.0
    %v261 = vrcp.pop %v260
    %v262 = vmul.f32 %v260, %v261
    %v263 = vsub.f32 1.0, %v262
    %v264 = vmul.f32 %v261, %v263
    %v265 = vadd.f32 %v261, %v264
    %vm266 = vweird.f32 %v260
    %vm267 = vweird.f32 %v261
    %vm268 = vmor %vm266, %vm267
    %v269 = vsel %vm268, %v261, %v265
    %v270 = vand.u32 2147483647, %v260
    %vm271 = vcmp.eq.f32.partialorder %v270, 8.507059e+37
    %v272 = vand.u32 %v260, 2147483648
    %v273 = vor.u32 1.1754944e-38, %v272
    %v274 = vsel %vm271, %v273, %v269
    %v275 = vmul.f32 1.0, %v274
    %v276 = vld [vmem:[#allocation2] sm:$0xf]
    %v277 = vsub.f32 %v220, %v232
    %v278 = vsub.f32 %v221, %v233
    %vm279 = vcmask 31744
    %v281 = vsel %vm279, %v277, 0
    %v284 = vsel %vm279, %v278, 0
    %vm286 = vcmask 1043456
    %v288 = vsel %vm286, %v276, 0
    %290 = vmatpush.msra.mxu0 0.0
    %291 = vmatpush.msra.mxu0 0.0
    %292 = vmatpush.msra.mxu0 0.0
    %293 = vmatpush.msra.mxu0 0.0
    %294 = vmatpush.msra.mxu0 0.0
    %295 = vmatpush.msra.mxu0 0.0
    %296 = vmatpush.msra.mxu0 0.0
    %297 = vmatpush.msra.mxu0 0.0
    %298 = vmatpush.msra.mxu0 0.0
    %299 = vmatpush.msra.mxu0 0.0
    %300 = vmatpush.msra.mxu0 0.0
    %301 = vmatpush.msra.mxu0 0.0
    %302 = vmatpush.msra.mxu0 0.0
    %303 = vmatpush.msra.mxu0 0.0
    %304 = vmatpush.msra.mxu0 0.0
    %305 = vmatpush.msra.mxu0 %v288
    %306 = vmatmul.f32.gmra.mxu0 %v281
    %v307 = vpop.f32.mrf.mxu0
    %v308 = vadd.f32 0.0, %v307
    %309 = vmatmul.f32.gmra.mxu0 %v284
    %v310 = vpop.f32.mrf.mxu0
    %v311 = vadd.f32 0.0, %v310
    %312 = vdwg.mxu0
    %v313 = vld [vmem:[%s3] sm:$0xff]
    %vm314 = vcmask 64512
    %v316 = vsel %vm314, %v244, 0
    %v319 = vsel %vm314, %v245, 0
    %321 = vmatpush.msra.mxu0 0.0
    %322 = vmatpush.msra.mxu0 0.0
    %323 = vmatpush.msra.mxu0 0.0
    %324 = vmatpush.msra.mxu0 0.0
    %325 = vmatpush.msra.mxu0 0.0
    %326 = vmatpush.msra.mxu0 0.0
    %327 = vmatpush.msra.mxu0 0.0
    %328 = vmatpush.msra.mxu0 0.0
    %329 = vmatpush.msra.mxu0 0.0
    %330 = vmatpush.msra.mxu0 0.0
    %331 = vmatpush.msra.mxu0 0.0
    %332 = vmatpush.msra.mxu0 0.0
    %333 = vmatpush.msra.mxu0 0.0
    %334 = vmatpush.msra.mxu0 0.0
    %335 = vmatpush.msra.mxu0 0.0
    %336 = vmatpush.msra.mxu0 %v313
    %337 = vmatmul.f32.gmra.mxu0 %v316
    %v338 = vpop.f32.mrf.mxu0
    %v339 = vadd.f32 0.0, %v338
    %340 = vmatmul.f32.gmra.mxu0 %v319
    %v341 = vpop.f32.mrf.mxu0
    %v342 = vadd.f32 0.0, %v341
    %343 = vdwg.mxu0
    %v345 = vsel %vm279, %v232, 0
    %v348 = vsel %vm279, %v233, 0
    %350 = vmatpush.msra.mxu0 0.0
    %351 = vmatpush.msra.mxu0 0.0
    %352 = vmatpush.msra.mxu0 0.0
    %353 = vmatpush.msra.mxu0 0.0
    %354 = vmatpush.msra.mxu0 0.0
    %355 = vmatpush.msra.mxu0 0.0
    %356 = vmatpush.msra.mxu0 0.0
    %357 = vmatpush.msra.mxu0 0.0
    %358 = vmatpush.msra.mxu0 0.0
    %359 = vmatpush.msra.mxu0 0.0
    %360 = vmatpush.msra.mxu0 0.0
    %361 = vmatpush.msra.mxu0 0.0
    %362 = vmatpush.msra.mxu0 0.0
    %363 = vmatpush.msra.mxu0 0.0
    %364 = vmatpush.msra.mxu0 0.0
    %365 = vmatpush.msra.mxu0 %v288
    %366 = vmatmul.f32.gmra.mxu0 %v345
    %v367 = vpop.f32.mrf.mxu0
    %v368 = vadd.f32 %v339, %v367
    %369 = vmatmul.f32.gmra.mxu0 %v348
    %v370 = vpop.f32.mrf.mxu0
    %v371 = vadd.f32 %v342, %v370
    %372 = vdwg.mxu0
    %v374 = vsel %vm314, %v246, 0
    %v377 = vsel %vm314, %v247, 0
    %379 = vmatpush.msra.mxu0 0.0
    %380 = vmatpush.msra.mxu0 0.0
    %381 = vmatpush.msra.mxu0 0.0
    %382 = vmatpush.msra.mxu0 0.0
    %383 = vmatpush.msra.mxu0 0.0
    %384 = vmatpush.msra.mxu0 0.0
    %385 = vmatpush.msra.mxu0 0.0
    %386 = vmatpush.msra.mxu0 0.0
    %387 = vmatpush.msra.mxu0 0.0
    %388 = vmatpush.msra.mxu0 0.0
    %389 = vmatpush.msra.mxu0 0.0
    %390 = vmatpush.msra.mxu0 0.0
    %391 = vmatpush.msra.mxu0 0.0
    %392 = vmatpush.msra.mxu0 0.0
    %393 = vmatpush.msra.mxu0 0.0
    %394 = vmatpush.msra.mxu0 %v204
    %395 = vmatmul.f32.gmra.mxu0 %v374
    %v396 = vpop.f32.mrf.mxu0
    %v397 = vadd.f32 0.0, %v396
    %398 = vmatmul.f32.gmra.mxu0 %v377
    %v399 = vpop.f32.mrf.mxu0
    %v400 = vadd.f32 0.0, %v399
    %401 = vdwg.mxu0
    %v402 = vadd.f32 %v308, %v397
    %v403 = vadd.f32 %v311, %v400
    %v404 = vmul.f32 %v402, %v402
    %v405 = vmul.f32 %v403, %v403
    %v406 = vsel %vm165, %v404, 0.0
    %407 = vadd.xlane.f32.xlu0 %v406
    %v408 = vpop.xlane.xlu0 %407
    %v409 = vsel %vm165, %v405, 0.0
    %410 = vadd.xlane.f32.xlu0 %v409
    %v411 = vpop.xlane.xlu0 %410
    %v412 = vld [vmem:[#allocation5] sm:$0xff]
    %v413 = vld [vmem:[#allocation5 + $0x8] sm:$0xff]
    %v414 = vld [vmem:[#allocation5 + $0x10] sm:$0xff]
    %v415 = vld [vmem:[#allocation5 + $0x18] sm:$0xff]
    %v416 = vld [vmem:[%s8] sm:$0x1]
    %v418 = vperm.slane %v416, 0
    %v420 = vmul.f32 %v408, %v418
    %v421 = vmul.f32 %v411, %v418
    %v423 = vsel %vm165, %v368, 0
    %v426 = vsel %vm165, %v371, 0
    %428 = vmatpush.msra.mxu0 0.0
    %429 = vmatpush.msra.mxu0 0.0
    %430 = vmatpush.msra.mxu0 0.0
    %431 = vmatpush.msra.mxu0 0.0
    %432 = vmatpush.msra.mxu0 0.0
    %433 = vmatpush.msra.mxu0 0.0
    %434 = vmatpush.msra.mxu0 0.0
    %435 = vmatpush.msra.mxu0 0.0
    %436 = vmatpush.msra.mxu0 0.0
    %437 = vmatpush.msra.mxu0 0.0
    %438 = vmatpush.msra.mxu0 0.0
    %439 = vmatpush.msra.mxu0 0.0
    %440 = vmatpush.msra.mxu0 %v415
    %441 = vmatpush.msra.mxu0 %v414
    %442 = vmatpush.msra.mxu0 %v413
    %443 = vmatpush.msra.mxu0 %v412
    %444 = vmatmul.f32.gmra.mxu0 %v423
    %v445 = vpop.f32.mrf.mxu0
    %v446 = vadd.f32 %v420, %v445
    %447 = vmatmul.f32.gmra.mxu0 %v426
    %v448 = vpop.f32.mrf.mxu0
    %v449 = vadd.f32 %v421, %v448
    %450 = vdwg.mxu0
    %v451 = vld [vmem:[%s9] sm:$0x1]
    %v453 = vperm.slane %v451, 0
    %v455 = vadd.f32 %v446, %v453
    %v456 = vadd.f32 %v449, %v453
    %v457 = vxor.u32 %v455, 2147483648
    %v458 = vxor.u32 %v456, 2147483648
    %v459 = vmul.f32 %v457, 1.442695
    %v460 = vpow.pop %v459
    %v461 = vmul.f32 %v458, 1.442695
    %v462 = vpow.pop %v461
    %v463 = vadd.f32 %v460, 1.0
    %v464 = vadd.f32 %v462, 1.0
    %v465 = vrcp.pop %v463
    %v466 = vmul.f32 %v463, %v465
    %v467 = vsub.f32 1.0, %v466
    %v468 = vmul.f32 %v465, %v467
    %v469 = vadd.f32 %v465, %v468
    %vm470 = vweird.f32 %v463
    %vm471 = vweird.f32 %v465
    %vm472 = vmor %vm470, %vm471
    %v473 = vsel %vm472, %v465, %v469
    %v474 = vand.u32 2147483647, %v463
    %vm475 = vcmp.eq.f32.partialorder %v474, 8.507059e+37
    %v476 = vand.u32 %v463, 2147483648
    %v477 = vor.u32 1.1754944e-38, %v476
    %v478 = vsel %vm475, %v477, %v473
    %v479 = vmul.f32 1.0, %v478
    %v480 = vrcp.pop %v464
    %v481 = vmul.f32 %v464, %v480
    %v482 = vsub.f32 1.0, %v481
    %v483 = vmul.f32 %v480, %v482
    %v484 = vadd.f32 %v480, %v483
    %vm485 = vweird.f32 %v464
    %vm486 = vweird.f32 %v480
    %vm487 = vmor %vm485, %vm486
    %v488 = vsel %vm487, %v480, %v484
    %v489 = vand.u32 2147483647, %v464
    %vm490 = vcmp.eq.f32.partialorder %v489, 8.507059e+37
    %v491 = vand.u32 %v464, 2147483648
    %v492 = vor.u32 1.1754944e-38, %v491
    %v493 = vsel %vm490, %v492, %v488
    %v494 = vmul.f32 1.0, %v493
    %v495 = vmul.f32 %v455, %v479
    %v496 = vmul.f32 %v456, %v494
    %v497 = vld [vmem:[#allocation7] sm:$0xff]
    %v498 = vld [vmem:[#allocation7 + $0x8] sm:$0xff]
    %v499 = vld [vmem:[#allocation7 + $0x10] sm:$0xff]
    %v500 = vld [vmem:[#allocation7 + $0x18] sm:$0xff]
    %v501 = vld [vmem:[%s11] sm:$0x1]
    %v503 = vperm.slane %v501, 0
    %v506 = vsel %vm165, %v495, 0
    %v509 = vsel %vm165, %v496, 0
    %511 = vmatpush.msra.mxu0 0.0
    %512 = vmatpush.msra.mxu0 0.0
    %513 = vmatpush.msra.mxu0 0.0
    %514 = vmatpush.msra.mxu0 0.0
    %515 = vmatpush.msra.mxu0 0.0
    %516 = vmatpush.msra.mxu0 0.0
    %517 = vmatpush.msra.mxu0 0.0
    %518 = vmatpush.msra.mxu0 0.0
    %519 = vmatpush.msra.mxu0 0.0
    %520 = vmatpush.msra.mxu0 0.0
    %521 = vmatpush.msra.mxu0 0.0
    %522 = vmatpush.msra.mxu0 0.0
    %523 = vmatpush.msra.mxu0 %v500
    %524 = vmatpush.msra.mxu0 %v499
    %525 = vmatpush.msra.mxu0 %v498
    %526 = vmatpush.msra.mxu0 %v497
    %527 = vmatmul.f32.gmra.mxu0 %v506
    %v528 = vpop.f32.mrf.mxu0
    %v529 = vadd.f32 %v503, %v528
    %530 = vmatmul.f32.gmra.mxu0 %v509
    %v531 = vpop.f32.mrf.mxu0
    %v532 = vadd.f32 %v503, %v531
    %533 = vdwg.mxu0
    %v534 = vxor.u32 %v529, 2147483648
    %v535 = vxor.u32 %v532, 2147483648
    %v536 = vmul.f32 %v534, 1.442695
    %v537 = vpow.pop %v536
    %v538 = vmul.f32 %v535, 1.442695
    %v539 = vpow.pop %v538
    %v540 = vadd.f32 %v537, 1.0
    %v541 = vadd.f32 %v539, 1.0
    %v542 = vrcp.pop %v540
    %v543 = vmul.f32 %v540, %v542
    %v544 = vsub.f32 1.0, %v543
    %v545 = vmul.f32 %v542, %v544
    %v546 = vadd.f32 %v542, %v545
    %vm547 = vweird.f32 %v540
    %vm548 = vweird.f32 %v542
    %vm549 = vmor %vm547, %vm548
    %v550 = vsel %vm549, %v542, %v546
    %v551 = vand.u32 2147483647, %v540
    %vm552 = vcmp.eq.f32.partialorder %v551, 8.507059e+37
    %v553 = vand.u32 %v540, 2147483648
    %v554 = vor.u32 1.1754944e-38, %v553
    %v555 = vsel %vm552, %v554, %v550
    %v556 = vmul.f32 1.0, %v555
    %v557 = vrcp.pop %v541
    %v558 = vmul.f32 %v541, %v557
    %v559 = vsub.f32 1.0, %v558
    %v560 = vmul.f32 %v557, %v559
    %v561 = vadd.f32 %v557, %v560
    %vm562 = vweird.f32 %v541
    %vm563 = vweird.f32 %v557
    %vm564 = vmor %vm562, %vm563
    %v565 = vsel %vm564, %v557, %v561
    %v566 = vand.u32 2147483647, %v541
    %vm567 = vcmp.eq.f32.partialorder %v566, 8.507059e+37
    %v568 = vand.u32 %v541, 2147483648
    %v569 = vor.u32 1.1754944e-38, %v568
    %v570 = vsel %vm567, %v569, %v565
    %v571 = vmul.f32 1.0, %v570
    %v572 = vmul.f32 %v529, %v556
    %v573 = vmul.f32 %v532, %v571
    %v574 = vld [vmem:[#allocation8] sm:$0xff]
    %v575 = vld [vmem:[#allocation8 + $0x8] sm:$0xff]
    %v576 = vld [vmem:[#allocation8 + $0x10] sm:$0xff]
    %v577 = vld [vmem:[#allocation8 + $0x18] sm:$0xff]
    %v578 = vld [vmem:[%s13] sm:$0x1]
    %v580 = vperm.slane %v578, 0
    %v583 = vsel %vm165, %v572, 0
    %v586 = vsel %vm165, %v573, 0
    %588 = vmatpush.msra.mxu0 0.0
    %589 = vmatpush.msra.mxu0 0.0
    %590 = vmatpush.msra.mxu0 0.0
    %591 = vmatpush.msra.mxu0 0.0
    %592 = vmatpush.msra.mxu0 0.0
    %593 = vmatpush.msra.mxu0 0.0
    %594 = vmatpush.msra.mxu0 0.0
    %595 = vmatpush.msra.mxu0 0.0
    %596 = vmatpush.msra.mxu0 0.0
    %597 = vmatpush.msra.mxu0 0.0
    %598 = vmatpush.msra.mxu0 0.0
    %599 = vmatpush.msra.mxu0 0.0
    %600 = vmatpush.msra.mxu0 %v577
    %601 = vmatpush.msra.mxu0 %v576
    %602 = vmatpush.msra.mxu0 %v575
    %603 = vmatpush.msra.mxu0 %v574
    %604 = vmatmul.f32.gmra.mxu0 %v583
    %v605 = vpop.f32.mrf.mxu0
    %v606 = vadd.f32 %v580, %v605
    %607 = vmatmul.f32.gmra.mxu0 %v586
    %v608 = vpop.f32.mrf.mxu0
    %v609 = vadd.f32 %v580, %v608
    %610 = vdwg.mxu0
    %v611 = vxor.u32 %v606, 2147483648
    %v612 = vxor.u32 %v609, 2147483648
    %v613 = vmul.f32 %v611, 1.442695
    %v614 = vpow.pop %v613
    %v615 = vmul.f32 %v612, 1.442695
    %v616 = vpow.pop %v615
    %v617 = vadd.f32 %v614, 1.0
    %v618 = vadd.f32 %v616, 1.0
    %v619 = vrcp.pop %v617
    %v620 = vmul.f32 %v617, %v619
    %v621 = vsub.f32 1.0, %v620
    %v622 = vmul.f32 %v619, %v621
    %v623 = vadd.f32 %v619, %v622
    %vm624 = vweird.f32 %v617
    %vm625 = vweird.f32 %v619
    %vm626 = vmor %vm624, %vm625
    %v627 = vsel %vm626, %v619, %v623
    %v628 = vand.u32 2147483647, %v617
    %vm629 = vcmp.eq.f32.partialorder %v628, 8.507059e+37
    %v630 = vand.u32 %v617, 2147483648
    %v631 = vor.u32 1.1754944e-38, %v630
    %v632 = vsel %vm629, %v631, %v627
    %v633 = vmul.f32 1.0, %v632
    %v634 = vrcp.pop %v618
    %v635 = vmul.f32 %v618, %v634
    %v636 = vsub.f32 1.0, %v635
    %v637 = vmul.f32 %v634, %v636
    %v638 = vadd.f32 %v634, %v637
    %vm639 = vweird.f32 %v618
    %vm640 = vweird.f32 %v634
    %vm641 = vmor %vm639, %vm640
    %v642 = vsel %vm641, %v634, %v638
    %v643 = vand.u32 2147483647, %v618
    %vm644 = vcmp.eq.f32.partialorder %v643, 8.507059e+37
    %v645 = vand.u32 %v618, 2147483648
    %v646 = vor.u32 1.1754944e-38, %v645
    %v647 = vsel %vm644, %v646, %v642
    %v648 = vmul.f32 1.0, %v647
    %v649 = vmul.f32 %v606, %v633
    %v650 = vmul.f32 %v609, %v648
    %v651 = vld [vmem:[#allocation10] sm:$0xff]
    %v652 = vld [vmem:[#allocation10 + $0x8] sm:$0xff]
    %v653 = vld [vmem:[#allocation10 + $0x10] sm:$0xff]
    %v654 = vld [vmem:[#allocation10 + $0x18] sm:$0xff]
    %v655 = vld [vmem:[#allocation11] sm:$0x1]
    %v657 = vperm.slane %v655, 0
    %v660 = vsel %vm165, %v649, 0
    %v663 = vsel %vm165, %v650, 0
    %665 = vmatpush.msra.mxu0 0.0
    %666 = vmatpush.msra.mxu0 0.0
    %667 = vmatpush.msra.mxu0 0.0
    %668 = vmatpush.msra.mxu0 0.0
    %669 = vmatpush.msra.mxu0 0.0
    %670 = vmatpush.msra.mxu0 0.0
    %671 = vmatpush.msra.mxu0 0.0
    %672 = vmatpush.msra.mxu0 0.0
    %673 = vmatpush.msra.mxu0 0.0
    %674 = vmatpush.msra.mxu0 0.0
    %675 = vmatpush.msra.mxu0 0.0
    %676 = vmatpush.msra.mxu0 0.0
    %677 = vmatpush.msra.mxu0 %v654
    %678 = vmatpush.msra.mxu0 %v653
    %679 = vmatpush.msra.mxu0 %v652
    %680 = vmatpush.msra.mxu0 %v651
    %681 = vmatmul.f32.gmra.mxu0 %v660
    %v682 = vpop.f32.mrf.mxu0
    %v683 = vadd.f32 %v657, %v682
    %684 = vmatmul.f32.gmra.mxu0 %v663
    %v685 = vpop.f32.mrf.mxu0
    %v686 = vadd.f32 %v657, %v685
    %687 = vdwg.mxu0
    %v688 = vxor.u32 %v683, 2147483648
    %v689 = vxor.u32 %v686, 2147483648
    %v690 = vmul.f32 %v688, 1.442695
    %v691 = vpow.pop %v690
    %v692 = vmul.f32 %v689, 1.442695
    %v693 = vpow.pop %v692
    %v694 = vadd.f32 %v691, 1.0
    %v695 = vadd.f32 %v693, 1.0
    %v696 = vrcp.pop %v694
    %v697 = vmul.f32 %v694, %v696
    %v698 = vsub.f32 1.0, %v697
    %v699 = vmul.f32 %v696, %v698
    %v700 = vadd.f32 %v696, %v699
    %vm701 = vweird.f32 %v694
    %vm702 = vweird.f32 %v696
    %vm703 = vmor %vm701, %vm702
    %v704 = vsel %vm703, %v696, %v700
    %v705 = vand.u32 2147483647, %v694
    %vm706 = vcmp.eq.f32.partialorder %v705, 8.507059e+37
    %v707 = vand.u32 %v694, 2147483648
    %v708 = vor.u32 1.1754944e-38, %v707
    %v709 = vsel %vm706, %v708, %v704
    %v710 = vmul.f32 1.0, %v709
    %v711 = vrcp.pop %v695
    %v712 = vmul.f32 %v695, %v711
    %v713 = vsub.f32 1.0, %v712
    %v714 = vmul.f32 %v711, %v713
    %v715 = vadd.f32 %v711, %v714
    %vm716 = vweird.f32 %v695
    %vm717 = vweird.f32 %v711
    %vm718 = vmor %vm716, %vm717
    %v719 = vsel %vm718, %v711, %v715
    %v720 = vand.u32 2147483647, %v695
    %vm721 = vcmp.eq.f32.partialorder %v720, 8.507059e+37
    %v722 = vand.u32 %v695, 2147483648
    %v723 = vor.u32 1.1754944e-38, %v722
    %v724 = vsel %vm721, %v723, %v719
    %v725 = vmul.f32 1.0, %v724
    %v726 = vmul.f32 %v683, %v710
    %v727 = vmul.f32 %v686, %v725
    %v728 = vld [vmem:[#allocation13] sm:$0x1]
    %v730 = vperm.slane %v728, 0
    %v732 = vmul.f32 %v726, %v730
    %v733 = vmul.f32 %v727, %v730
    %v734 = vsel %vm165, %v732, 0.0
    %735 = vadd.xlane.f32.xlu0 %v734
    %v736 = vpop.xlane.xlu0 %735
    %v737 = vsel %vm165, %v733, 0.0
    %738 = vadd.xlane.f32.xlu0 %v737
    %v739 = vpop.xlane.xlu0 %738
    %v740 = vmul.f32 %v402, %v736
    %v741 = vmul.f32 %v403, %v739
    %v743 = vsel %vm256, %v255, 0
    %745 = vmatpush.msra.mxu0 0.0
    %746 = vmatpush.msra.mxu0 0.0
    %747 = vmatpush.msra.mxu0 0.0
    %748 = vmatpush.msra.mxu0 0.0
    %749 = vmatpush.msra.mxu0 0.0
    %750 = vmatpush.msra.mxu0 0.0
    %751 = vmatpush.msra.mxu0 0.0
    %752 = vmatpush.msra.mxu0 0.0
    %753 = vmatpush.msra.mxu0 0.0
    %754 = vmatpush.msra.mxu0 0.0
    %755 = vmatpush.msra.mxu0 0.0
    %756 = vmatpush.msra.mxu0 0.0
    %757 = vmatpush.msra.mxu0 0.0
    %758 = vmatpush.msra.mxu0 0.0
    %759 = vmatpush.msra.mxu0 %v741
    %760 = vmatpush.msra.mxu0 %v740
    %761 = vmatmul.f32.gmra.mxu0 %v743
    %v762 = vpop.f32.mrf.mxu0
    %v763 = vadd.f32 0.0, %v762
    %764 = vdwg.mxu0
    %v765 = vmul.f32 %v763, %v275
    %v766 = vadd.f32 %v204, %v765
    %767 = vmatpush.msra.mxu0 0.0
    %768 = vmatpush.msra.mxu0 0.0
    %769 = vmatpush.msra.mxu0 0.0
    %770 = vmatpush.msra.mxu0 0.0
    %771 = vmatpush.msra.mxu0 0.0
    %772 = vmatpush.msra.mxu0 0.0
    %773 = vmatpush.msra.mxu0 0.0
    %774 = vmatpush.msra.mxu0 0.0
    %775 = vmatpush.msra.mxu0 0.0
    %776 = vmatpush.msra.mxu0 0.0
    %777 = vmatpush.msra.mxu0 0.0
    %778 = vmatpush.msra.mxu0 0.0
    %779 = vmatpush.msra.mxu0 0.0
    %780 = vmatpush.msra.mxu0 0.0
    %781 = vmatpush.msra.mxu0 0.0
    %782 = vmatpush.msra.mxu0 %v766
    %783 = vmatmul.f32.gmra.mxu0 %v374
    %v784 = vpop.f32.mrf.mxu0
    %v785 = vadd.f32 0.0, %v784
    %786 = vmatmul.f32.gmra.mxu0 %v377
    %v787 = vpop.f32.mrf.mxu0
    %v788 = vadd.f32 0.0, %v787
    %789 = vdwg.mxu0
    %v790 = vadd.f32 %v308, %v785
    %v791 = vadd.f32 %v311, %v788
    %v792 = vmul.f32 %v790, %v790
    %v793 = vmul.f32 %v791, %v791
    %v794 = vsel %vm165, %v792, 0.0
    %795 = vadd.xlane.f32.xlu0 %v794
    %v796 = vpop.xlane.xlu0 %795
    %v797 = vsel %vm165, %v793, 0.0
    %798 = vadd.xlane.f32.xlu0 %v797
    %v799 = vpop.xlane.xlu0 %798
    %s800 = scalar_lea.vmem [#allocation5], 32
    %v801 = vld [vmem:[%s800] sm:$0xff]
    %v802 = vld [vmem:[%s800 + $0x8] sm:$0xff]
    %v803 = vld [vmem:[%s800 + $0x10] sm:$0xff]
    %v804 = vld [vmem:[%s800 + $0x18] sm:$0xff]
    %s805 = scalar_lea.vmem %s8, 1
    %v806 = vld [vmem:[%s805] sm:$0x1]
    %v808 = vperm.slane %v806, 0
    %v810 = vmul.f32 %v796, %v808
    %v811 = vmul.f32 %v799, %v808
    %812 = vmatpush.msra.mxu0 0.0
    %813 = vmatpush.msra.mxu0 0.0
    %814 = vmatpush.msra.mxu0 0.0
    %815 = vmatpush.msra.mxu0 0.0
    %816 = vmatpush.msra.mxu0 0.0
    %817 = vmatpush.msra.mxu0 0.0
    %818 = vmatpush.msra.mxu0 0.0
    %819 = vmatpush.msra.mxu0 0.0
    %820 = vmatpush.msra.mxu0 0.0
    %821 = vmatpush.msra.mxu0 0.0
    %822 = vmatpush.msra.mxu0 0.0
    %823 = vmatpush.msra.mxu0 0.0
    %824 = vmatpush.msra.mxu0 %v804
    %825 = vmatpush.msra.mxu0 %v803
    %826 = vmatpush.msra.mxu0 %v802
    %827 = vmatpush.msra.mxu0 %v801
    %828 = vmatmul.f32.gmra.mxu0 %v423
    %v829 = vpop.f32.mrf.mxu0
    %v830 = vadd.f32 %v810, %v829
    %831 = vmatmul.f32.gmra.mxu0 %v426
    %v832 = vpop.f32.mrf.mxu0
    %v833 = vadd.f32 %v811, %v832
    %834 = vdwg.mxu0
    %s835 = scalar_lea.vmem %s9, 1
    %v836 = vld [vmem:[%s835] sm:$0x1]
    %v838 = vperm.slane %v836, 0
    %v840 = vadd.f32 %v830, %v838
    %v841 = vadd.f32 %v833, %v838
    %v842 = vxor.u32 %v840, 2147483648
    %v843 = vxor.u32 %v841, 2147483648
    %v844 = vmul.f32 %v842, 1.442695
    %v845 = vpow.pop %v844
    %v846 = vmul.f32 %v843, 1.442695
    %v847 = vpow.pop %v846
    %v848 = vadd.f32 %v845, 1.0
    %v849 = vadd.f32 %v847, 1.0
    %v850 = vrcp.pop %v848
    %v851 = vmul.f32 %v848, %v850
    %v852 = vsub.f32 1.0, %v851
    %v853 = vmul.f32 %v850, %v852
    %v854 = vadd.f32 %v850, %v853
    %vm855 = vweird.f32 %v848
    %vm856 = vweird.f32 %v850
    %vm857 = vmor %vm855, %vm856
    %v858 = vsel %vm857, %v850, %v854
    %v859 = vand.u32 2147483647, %v848
    %vm860 = vcmp.eq.f32.partialorder %v859, 8.507059e+37
    %v861 = vand.u32 %v848, 2147483648
    %v862 = vor.u32 1.1754944e-38, %v861
    %v863 = vsel %vm860, %v862, %v858
    %v864 = vmul.f32 1.0, %v863
    %v865 = vrcp.pop %v849
    %v866 = vmul.f32 %v849, %v865
    %v867 = vsub.f32 1.0, %v866
    %v868 = vmul.f32 %v865, %v867
    %v869 = vadd.f32 %v865, %v868
    %vm870 = vweird.f32 %v849
    %vm871 = vweird.f32 %v865
    %vm872 = vmor %vm870, %vm871
    %v873 = vsel %vm872, %v865, %v869
    %v874 = vand.u32 2147483647, %v849
    %vm875 = vcmp.eq.f32.partialorder %v874, 8.507059e+37
    %v876 = vand.u32 %v849, 2147483648
    %v877 = vor.u32 1.1754944e-38, %v876
    %v878 = vsel %vm875, %v877, %v873
    %v879 = vmul.f32 1.0, %v878
    %v880 = vmul.f32 %v840, %v864
    %v881 = vmul.f32 %v841, %v879
    %s882 = scalar_lea.vmem [#allocation7], 32
    %v883 = vld [vmem:[%s882] sm:$0xff]
    %v884 = vld [vmem:[%s882 + $0x8] sm:$0xff]
    %v885 = vld [vmem:[%s882 + $0x10] sm:$0xff]
    %v886 = vld [vmem:[%s882 + $0x18] sm:$0xff]
    %s887 = scalar_lea.vmem %s11, 1
    %v888 = vld [vmem:[%s887] sm:$0x1]
    %v890 = vperm.slane %v888, 0
    %v893 = vsel %vm165, %v880, 0
    %v896 = vsel %vm165, %v881, 0
    %898 = vmatpush.msra.mxu0 0.0
    %899 = vmatpush.msra.mxu0 0.0
    %900 = vmatpush.msra.mxu0 0.0
    %901 = vmatpush.msra.mxu0 0.0
    %902 = vmatpush.msra.mxu0 0.0
    %903 = vmatpush.msra.mxu0 0.0
    %904 = vmatpush.msra.mxu0 0.0
    %905 = vmatpush.msra.mxu0 0.0
    %906 = vmatpush.msra.mxu0 0.0
    %907 = vmatpush.msra.mxu0 0.0
    %908 = vmatpush.msra.mxu0 0.0
    %909 = vmatpush.msra.mxu0 0.0
    %910 = vmatpush.msra.mxu0 %v886
    %911 = vmatpush.msra.mxu0 %v885
    %912 = vmatpush.msra.mxu0 %v884
    %913 = vmatpush.msra.mxu0 %v883
    %914 = vmatmul.f32.gmra.mxu0 %v893
    %v915 = vpop.f32.mrf.mxu0
    %v916 = vadd.f32 %v890, %v915
    %917 = vmatmul.f32.gmra.mxu0 %v896
    %v918 = vpop.f32.mrf.mxu0
    %v919 = vadd.f32 %v890, %v918
    %920 = vdwg.mxu0
    %v921 = vxor.u32 %v916, 2147483648
    %v922 = vxor.u32 %v919, 2147483648
    %v923 = vmul.f32 %v921, 1.442695
    %v924 = vpow.pop %v923
    %v925 = vmul.f32 %v922, 1.442695
    %v926 = vpow.pop %v925
    %v927 = vadd.f32 %v924, 1.0
    %v928 = vadd.f32 %v926, 1.0
    %v929 = vrcp.pop %v927
    %v930 = vmul.f32 %v927, %v929
    %v931 = vsub.f32 1.0, %v930
    %v932 = vmul.f32 %v929, %v931
    %v933 = vadd.f32 %v929, %v932
    %vm934 = vweird.f32 %v927
    %vm935 = vweird.f32 %v929
    %vm936 = vmor %vm934, %vm935
    %v937 = vsel %vm936, %v929, %v933
    %v938 = vand.u32 2147483647, %v927
    %vm939 = vcmp.eq.f32.partialorder %v938, 8.507059e+37
    %v940 = vand.u32 %v927, 2147483648
    %v941 = vor.u32 1.1754944e-38, %v940
    %v942 = vsel %vm939, %v941, %v937
    %v943 = vmul.f32 1.0, %v942
    %v944 = vrcp.pop %v928
    %v945 = vmul.f32 %v928, %v944
    %v946 = vsub.f32 1.0, %v945
    %v947 = vmul.f32 %v944, %v946
    %v948 = vadd.f32 %v944, %v947
    %vm949 = vweird.f32 %v928
    %vm950 = vweird.f32 %v944
    %vm951 = vmor %vm949, %vm950
    %v952 = vsel %vm951, %v944, %v948
    %v953 = vand.u32 2147483647, %v928
    %vm954 = vcmp.eq.f32.partialorder %v953, 8.507059e+37
    %v955 = vand.u32 %v928, 2147483648
    %v956 = vor.u32 1.1754944e-38, %v955
    %v957 = vsel %vm954, %v956, %v952
    %v958 = vmul.f32 1.0, %v957
    %v959 = vmul.f32 %v916, %v943
    %v960 = vmul.f32 %v919, %v958
    %s961 = scalar_lea.vmem [#allocation8], 32
    %v962 = vld [vmem:[%s961] sm:$0xff]
    %v963 = vld [vmem:[%s961 + $0x8] sm:$0xff]
    %v964 = vld [vmem:[%s961 + $0x10] sm:$0xff]
    %v965 = vld [vmem:[%s961 + $0x18] sm:$0xff]
    %s966 = scalar_lea.vmem %s13, 1
    %v967 = vld [vmem:[%s966] sm:$0x1]
    %v969 = vperm.slane %v967, 0
    %v972 = vsel %vm165, %v959, 0
    %v975 = vsel %vm165, %v960, 0
    %977 = vmatpush.msra.mxu0 0.0
    %978 = vmatpush.msra.mxu0 0.0
    %979 = vmatpush.msra.mxu0 0.0
    %980 = vmatpush.msra.mxu0 0.0
    %981 = vmatpush.msra.mxu0 0.0
    %982 = vmatpush.msra.mxu0 0.0
    %983 = vmatpush.msra.mxu0 0.0
    %984 = vmatpush.msra.mxu0 0.0
    %985 = vmatpush.msra.mxu0 0.0
    %986 = vmatpush.msra.mxu0 0.0
    %987 = vmatpush.msra.mxu0 0.0
    %988 = vmatpush.msra.mxu0 0.0
    %989 = vmatpush.msra.mxu0 %v965
    %990 = vmatpush.msra.mxu0 %v964
    %991 = vmatpush.msra.mxu0 %v963
    %992 = vmatpush.msra.mxu0 %v962
    %993 = vmatmul.f32.gmra.mxu0 %v972
    %v994 = vpop.f32.mrf.mxu0
    %v995 = vadd.f32 %v969, %v994
    %996 = vmatmul.f32.gmra.mxu0 %v975
    %v997 = vpop.f32.mrf.mxu0
    %v998 = vadd.f32 %v969, %v997
    %999 = vdwg.mxu0
    %v1000 = vxor.u32 %v995, 2147483648
    %v1001 = vxor.u32 %v998, 2147483648
    %v1002 = vmul.f32 %v1000, 1.442695
    %v1003 = vpow.pop %v1002
    %v1004 = vmul.f32 %v1001, 1.442695
    %v1005 = vpow.pop %v1004
    %v1006 = vadd.f32 %v1003, 1.0
    %v1007 = vadd.f32 %v1005, 1.0
    %v1008 = vrcp.pop %v1006
    %v1009 = vmul.f32 %v1006, %v1008
    %v1010 = vsub.f32 1.0, %v1009
    %v1011 = vmul.f32 %v1008, %v1010
    %v1012 = vadd.f32 %v1008, %v1011
    %vm1013 = vweird.f32 %v1006
    %vm1014 = vweird.f32 %v1008
    %vm1015 = vmor %vm1013, %vm1014
    %v1016 = vsel %vm1015, %v1008, %v1012
    %v1017 = vand.u32 2147483647, %v1006
    %vm1018 = vcmp.eq.f32.partialorder %v1017, 8.507059e+37
    %v1019 = vand.u32 %v1006, 2147483648
    %v1020 = vor.u32 1.1754944e-38, %v1019
    %v1021 = vsel %vm1018, %v1020, %v1016
    %v1022 = vmul.f32 1.0, %v1021
    %v1023 = vrcp.pop %v1007
    %v1024 = vmul.f32 %v1007, %v1023
    %v1025 = vsub.f32 1.0, %v1024
    %v1026 = vmul.f32 %v1023, %v1025
    %v1027 = vadd.f32 %v1023, %v1026
    %vm1028 = vweird.f32 %v1007
    %vm1029 = vweird.f32 %v1023
    %vm1030 = vmor %vm1028, %vm1029
    %v1031 = vsel %vm1030, %v1023, %v1027
    %v1032 = vand.u32 2147483647, %v1007
    %vm1033 = vcmp.eq.f32.partialorder %v1032, 8.507059e+37
    %v1034 = vand.u32 %v1007, 2147483648
    %v1035 = vor.u32 1.1754944e-38, %v1034
    %v1036 = vsel %vm1033, %v1035, %v1031
    %v1037 = vmul.f32 1.0, %v1036
    %v1038 = vmul.f32 %v995, %v1022
    %v1039 = vmul.f32 %v998, %v1037
    %s1040 = scalar_lea.vmem [#allocation10], 32
    %v1041 = vld [vmem:[%s1040] sm:$0xff]
    %v1042 = vld [vmem:[%s1040 + $0x8] sm:$0xff]
    %v1043 = vld [vmem:[%s1040 + $0x10] sm:$0xff]
    %v1044 = vld [vmem:[%s1040 + $0x18] sm:$0xff]
    %s1045 = scalar_lea.vmem [#allocation11], 1
    %v1046 = vld [vmem:[%s1045] sm:$0x1]
    %v1048 = vperm.slane %v1046, 0
    %v1051 = vsel %vm165, %v1038, 0
    %v1054 = vsel %vm165, %v1039, 0
    %1056 = vmatpush.msra.mxu0 0.0
    %1057 = vmatpush.msra.mxu0 0.0
    %1058 = vmatpush.msra.mxu0 0.0
    %1059 = vmatpush.msra.mxu0 0.0
    %1060 = vmatpush.msra.mxu0 0.0
    %1061 = vmatpush.msra.mxu0 0.0
    %1062 = vmatpush.msra.mxu0 0.0
    %1063 = vmatpush.msra.mxu0 0.0
    %1064 = vmatpush.msra.mxu0 0.0
    %1065 = vmatpush.msra.mxu0 0.0
    %1066 = vmatpush.msra.mxu0 0.0
    %1067 = vmatpush.msra.mxu0 0.0
    %1068 = vmatpush.msra.mxu0 %v1044
    %1069 = vmatpush.msra.mxu0 %v1043
    %1070 = vmatpush.msra.mxu0 %v1042
    %1071 = vmatpush.msra.mxu0 %v1041
    %1072 = vmatmul.f32.gmra.mxu0 %v1051
    %v1073 = vpop.f32.mrf.mxu0
    %v1074 = vadd.f32 %v1048, %v1073
    %1075 = vmatmul.f32.gmra.mxu0 %v1054
    %v1076 = vpop.f32.mrf.mxu0
    %v1077 = vadd.f32 %v1048, %v1076
    %1078 = vdwg.mxu0
    %v1079 = vxor.u32 %v1074, 2147483648
    %v1080 = vxor.u32 %v1077, 2147483648
    %v1081 = vmul.f32 %v1079, 1.442695
    %v1082 = vpow.pop %v1081
    %v1083 = vmul.f32 %v1080, 1.442695
    %v1084 = vpow.pop %v1083
    %v1085 = vadd.f32 %v1082, 1.0
    %v1086 = vadd.f32 %v1084, 1.0
    %v1087 = vrcp.pop %v1085
    %v1088 = vmul.f32 %v1085, %v1087
    %v1089 = vsub.f32 1.0, %v1088
    %v1090 = vmul.f32 %v1087, %v1089
    %v1091 = vadd.f32 %v1087, %v1090
    %vm1092 = vweird.f32 %v1085
    %vm1093 = vweird.f32 %v1087
    %vm1094 = vmor %vm1092, %vm1093
    %v1095 = vsel %vm1094, %v1087, %v1091
    %v1096 = vand.u32 2147483647, %v1085
    %vm1097 = vcmp.eq.f32.partialorder %v1096, 8.507059e+37
    %v1098 = vand.u32 %v1085, 2147483648
    %v1099 = vor.u32 1.1754944e-38, %v1098
    %v1100 = vsel %vm1097, %v1099, %v1095
    %v1101 = vmul.f32 1.0, %v1100
    %v1102 = vrcp.pop %v1086
    %v1103 = vmul.f32 %v1086, %v1102
    %v1104 = vsub.f32 1.0, %v1103
    %v1105 = vmul.f32 %v1102, %v1104
    %v1106 = vadd.f32 %v1102, %v1105
    %vm1107 = vweird.f32 %v1086
    %vm1108 = vweird.f32 %v1102
    %vm1109 = vmor %vm1107, %vm1108
    %v1110 = vsel %vm1109, %v1102, %v1106
    %v1111 = vand.u32 2147483647, %v1086
    %vm1112 = vcmp.eq.f32.partialorder %v1111, 8.507059e+37
    %v1113 = vand.u32 %v1086, 2147483648
    %v1114 = vor.u32 1.1754944e-38, %v1113
    %v1115 = vsel %vm1112, %v1114, %v1110
    %v1116 = vmul.f32 1.0, %v1115
    %v1117 = vmul.f32 %v1074, %v1101
    %v1118 = vmul.f32 %v1077, %v1116
    %s1119 = scalar_lea.vmem [#allocation13], 1
    %v1120 = vld [vmem:[%s1119] sm:$0x1]
    %v1122 = vperm.slane %v1120, 0
    %v1124 = vmul.f32 %v1117, %v1122
    %v1125 = vmul.f32 %v1118, %v1122
    %v1126 = vsel %vm165, %v1124, 0.0
    %1127 = vadd.xlane.f32.xlu0 %v1126
    %v1128 = vpop.xlane.xlu0 %1127
    %v1129 = vsel %vm165, %v1125, 0.0
    %1130 = vadd.xlane.f32.xlu0 %v1129
    %v1131 = vpop.xlane.xlu0 %1130
    %v1132 = vmul.f32 %v790, %v1128
    %v1133 = vmul.f32 %v791, %v1131
    %1134 = vmatpush.msra.mxu0 0.0
    %1135 = vmatpush.msra.mxu0 0.0
    %1136 = vmatpush.msra.mxu0 0.0
    %1137 = vmatpush.msra.mxu0 0.0
    %1138 = vmatpush.msra.mxu0 0.0
    %1139 = vmatpush.msra.mxu0 0.0
    %1140 = vmatpush.msra.mxu0 0.0
    %1141 = vmatpush.msra.mxu0 0.0
    %1142 = vmatpush.msra.mxu0 0.0
    %1143 = vmatpush.msra.mxu0 0.0
    %1144 = vmatpush.msra.mxu0 0.0
    %1145 = vmatpush.msra.mxu0 0.0
    %1146 = vmatpush.msra.mxu0 0.0
    %1147 = vmatpush.msra.mxu0 0.0
    %1148 = vmatpush.msra.mxu0 %v1133
    %1149 = vmatpush.msra.mxu0 %v1132
    %1150 = vmatmul.f32.gmra.mxu0 %v743
    %v1151 = vpop.f32.mrf.mxu0
    %v1152 = vadd.f32 0.0, %v1151
    %1153 = vdwg.mxu0
    %v1154 = vmul.f32 %v1152, %v275
    %v1155 = vadd.f32 %v766, %v1154
    %1156 = vst.msk [vmem:[#allocation14] sm:$0xff] %vm165, %v1155
    // Predicated region
    $region98: #{clsf_forward.1} parent=1 // pred_check
      _
    $region99: #{clsf_forward.1} parent=1 // pred_check_branch
      %1158 = sbr.rel (0) target = $region101
    $region100: #{clsf_forward.1} parent=1 // pred_region
      %1160 = vsyncadd [#allocation4], 0
      %s1162 = sshll.u32 [#allocation14], 4
      %s1163 = int_to_ptr.vmem [resolvable:$true] %s1162
      %s1164 = sshll.u32 %s17, 4
      %s1165 = int_to_ptr.hbm [resolvable:$true] %s1164
      %1167 = dma.vmem_to_hbm [thread:$0]  %s1163, 128, %s1165, [#allocation4]
    $region101: #{clsf_forward.1} parent=1 // pred_fallthru
      _
    // Predicated region
    $region102: #{clsf_forward.1} parent=1 // pred_check
      _
    $region103: #{clsf_forward.1} parent=1 // pred_check_branch
      %1169 = sbr.rel (0) target = $region105
    $region104: #{clsf_forward.1} parent=1 // pred_region
      %1171 = dma.done [#allocation4], 128
    $region105: #{clsf_forward.1} parent=1 // pred_fallthru
      _
    %1172 = vsyncpa [#allocation3], 1
    %1173 = vsyncpa [#allocation6], 1
    %1174 = vsyncpa [#allocation9], 1
    %1175 = vsyncpa [#allocation12], 1
    %1176 = vsyncpa [#allocation4], 1

</llo_original>
